<compile_context>
chip_gen: v7x
topology: tpu7x:2x2x1
jax: 0.10.0
libtpu: 0.0.40
codegen_flags: <defaults>
</compile_context>

<pallas_src>
import functools
import math

import jax
import jax.numpy as jnp
from jax import lax
from jax.experimental import pallas as pl
from jax.experimental.pallas import tpu as pltpu


# ----------------------------- Pallas kernels -------------------------------

def _linear_kernel(x_ref, w_ref, b_ref, o_ref, acc_ref):
    # Blocks: x (tm, tk), w (tk, tn), b (1, tn), o (tm, tn).
    # Grid: (M_tiles, N_tiles, K_tiles), K innermost reduction.
    k = pl.program_id(2)

    @pl.when(k == 0)
    def _():
        acc_ref[...] = jnp.zeros_like(acc_ref)

    acc_ref[...] += jnp.dot(x_ref[...], w_ref[...],
                            preferred_element_type=jnp.float32)

    @pl.when(k == pl.num_programs(2) - 1)
    def _():
        o_ref[...] = (acc_ref[...] + b_ref[...].astype(jnp.float32)).astype(o_ref.dtype)


def _attn_kernel(q_ref, k_ref, v_ref, o_ref, *, h, heads_per_store):
    # q_ref: (tq, d_model) for one batch / q-tile, heads packed along lanes.
    # k_ref, v_ref: (S, d_model) (resident across q-tiles of the same batch).
    # o_ref: (tq, d_model), written lane-dense per head group.
    tq, d_model = o_ref.shape
    d_k = d_model // h
    scale = 1.0 / math.sqrt(d_k)

    q = q_ref[...]
    k = k_ref[...]
    v = v_ref[...]

    for g0 in range(0, h, heads_per_store):          # static loop, small h
        g1 = min(g0 + heads_per_store, h)
        ctxs = []
        for head in range(g0, g1):
            lo, hi = head * d_k, (head + 1) * d_k
            qh = q[:, lo:hi] * scale                  # fold 1/sqrt(d_k) into q
            kh = k[:, lo:hi]
            vh = v[:, lo:hi]

            # scores = qh @ kh^T without materializing the transpose.
            s = lax.dot_general(qh, kh, (((1,), (1,)), ((), ())),
                                preferred_element_type=jnp.float32)   # (tq, S) f32
            s = s - jnp.max(s, axis=-1, keepdims=True)
            # TODO(synk): on v6e/v7x exp could run in bf16 (EUP 2x); kept f32 for
            # v5e portability and accuracy.
            p = jnp.exp(s)
            denom = jnp.sum(p, axis=-1, keepdims=True)                # (tq, 1) f32

            ctx = jnp.dot(p.astype(vh.dtype), vh,
                          preferred_element_type=jnp.float32)         # (tq, d_k) f32
            # Normalize after PV (touches tq*d_k, not tq*S); EUP reciprocal.
            ctx = ctx * pl.reciprocal(denom, approx=True)
            ctxs.append(ctx.astype(o_ref.dtype))

        block = ctxs[0] if len(ctxs) == 1 else jnp.concatenate(ctxs, axis=-1)
        o_ref[:, g0 * d_k:g1 * d_k] = block           # lane-aligned group store


# ------------------------------ wrappers -------------------------------------

def _pick_tile(dim, pref, align, must_divide=False):
    """Pick a TPU-legal tile size (<= pref) for a dimension of size `dim`."""
    if dim <= pref:
        return dim                       # block equal to the full dim is always legal
    t = max(align, (pref // align) * align)
    if must_divide:
        while t > align and dim % t != 0:
            t -= align
        if dim % t != 0:
            return dim                   # fall back: single block along this axis
    return t


def linear(x, w, b, *, out_dtype=None, tm=512, tn=512, tk=512):
    """(M, K) @ (K, N) + (1, N) -> (M, N) with an f32 VMEM accumulator."""
    M, K = x.shape
    K2, N = w.shape
    assert K == K2
    out_dtype = out_dtype or x.dtype

    tm = _pick_tile(M, tm, 8)
    tn = _pick_tile(N, tn, 128)
    tk = _pick_tile(K, tk, 128, must_divide=True)    # reduction axis must tile exactly

    grid = (pl.cdiv(M, tm), pl.cdiv(N, tn), pl.cdiv(K, tk))
    cost = pl.CostEstimate(
        flops=2 * M * N * K,
        transcendentals=0,
        bytes_accessed=int(x.size * x.dtype.itemsize + w.size * w.dtype.itemsize
                           + b.size * b.dtype.itemsize
                           + M * N * jnp.dtype(out_dtype).itemsize),
    )

    return pl.pallas_call(
        _linear_kernel,
        out_shape=jax.ShapeDtypeStruct((M, N), out_dtype),
        grid_spec=pltpu.PrefetchScalarGridSpec(
            num_scalar_prefetch=0,
            grid=grid,
            in_specs=[
                pl.BlockSpec((tm, tk), lambda i, j, kk: (i, kk)),
                pl.BlockSpec((tk, tn), lambda i, j, kk: (kk, j)),
                pl.BlockSpec((1, tn), lambda i, j, kk: (0, j)),
            ],
            out_specs=pl.BlockSpec((tm, tn), lambda i, j, kk: (i, j)),
            scratch_shapes=[pltpu.VMEM((tm, tn), jnp.float32)],
        ),
        compiler_params=pltpu.CompilerParams(
            dimension_semantics=("parallel", "parallel", "arbitrary")),
        cost_estimate=cost,
    )(x, w, b)


def attention(q, k, v, h, *, tq_pref=256, out_dtype=None):
    """q, k, v: (B, S, d_model), heads packed in the feature dim -> (B, S, d_model)."""
    B, S, d_model = q.shape
    d_k = d_model // h
    out_dtype = out_dtype or q.dtype

    # q-tile: full S if small, else largest sublane-aligned divisor <= tq_pref.
    if S <= tq_pref:
        tq = S
    else:
        tq = (tq_pref // 8) * 8
        while tq > 8 and S % tq != 0:
            tq -= 8
        if S % tq != 0:
            tq = S                      # fall back: single q block
    num_q_tiles = S // tq

    # Group heads so each output store spans >= 128 lanes when d_k < 128.
    heads_per_store = 1 if d_k >= 128 else max(1, min(h, 128 // d_k))

    itemsize = q.dtype.itemsize
    cost = pl.CostEstimate(
        flops=4 * B * h * S * S * d_k,            # QK^T + PV
        transcendentals=B * h * S * S,            # exp
        bytes_accessed=int(itemsize * (q.size + k.size + v.size)
                           + B * S * d_model * jnp.dtype(out_dtype).itemsize),
    )

    return pl.pallas_call(
        functools.partial(_attn_kernel, h=h, heads_per_store=heads_per_store),
        out_shape=jax.ShapeDtypeStruct((B, S, d_model), out_dtype),
        grid_spec=pltpu.PrefetchScalarGridSpec(
            num_scalar_prefetch=0,
            grid=(B, num_q_tiles),
            in_specs=[
                pl.BlockSpec((None, tq, d_model), lambda b, qi: (b, qi, 0)),
                pl.BlockSpec((None, S, d_model), lambda b, qi: (b, 0, 0)),   # resident
                pl.BlockSpec((None, S, d_model), lambda b, qi: (b, 0, 0)),   # resident
            ],
            out_specs=pl.BlockSpec((None, tq, d_model), lambda b, qi: (b, qi, 0)),
        ),
        compiler_params=pltpu.CompilerParams(
            dimension_semantics=("parallel", "parallel"),
            vmem_limit_bytes=64 * 1024 * 1024),
        cost_estimate=cost,
    )(q, k, v)


def multi_head_attention(query, key, value, params, h, *, compute_dtype=jnp.bfloat16):
    """Forward pass of MultiHeadAttention (eval mode: dropout is identity, no mask)."""
    B, S, d_model = query.shape
    assert d_model % h == 0
    out_dtype = query.dtype

    def proj(x, w, b):
        y = linear(x.reshape(B * S, d_model).astype(compute_dtype),
                   w.astype(compute_dtype), b, out_dtype=compute_dtype)
        return y.reshape(B, S, d_model)

    # 1. Q/K/V projections: three tiled GEMMs, no stacked-activation HBM copy.
    q = proj(query, params["w_qkv"][0], params["b_qkv"][0])
    k = proj(key,   params["w_qkv"][1], params["b_qkv"][1])
    v = proj(value, params["w_qkv"][2], params["b_qkv"][2])

    # 2. Attention with heads packed along lanes; output is already (B, S, d_model)
    #    lane-dense, so no transpose before the output projection.
    ctx = attention(q, k, v, h, out_dtype=compute_dtype)

    # 3. Output projection (same tiled kernel), back to the caller dtype.
    out = linear(ctx.reshape(B * S, d_model),
                 params["wo"].astype(compute_dtype), params["bo"],
                 out_dtype=out_dtype)
    return out.reshape(B, S, d_model)


# --------------------------- parameter creation -------------------------------

def init_params(key, d_model):
    """nn.Linear-style init; weights stored as (d_in, d_out); q/k/v stacked on axis 0."""
    bound = 1.0 / math.sqrt(d_model)
    kwq, kbq, kwo, kbo = jax.random.split(key, 4)
    return {
        "w_qkv": jax.random.uniform(kwq, (3, d_model, d_model), jnp.float32, -bound, bound),
        "b_qkv": jax.random.uniform(kbq, (3, 1, d_model), jnp.float32, -bound, bound),
        "wo": jax.random.uniform(kwo, (d_model, d_model), jnp.float32, -bound, bound),
        "bo": jax.random.uniform(kbo, (1, d_model), jnp.float32, -bound, bound),
    }


# ------------------------------ reference ------------------------------------

def reference(query, key, value, params, h):
    B, S, d_model = query.shape
    d_k = d_model // h

    def proj(x, w, b):
        y = x.reshape(B * S, d_model) @ w + b
        return y.reshape(B, S, h, d_k).transpose(0, 2, 1, 3)

    q = proj(query, params["w_qkv"][0], params["b_qkv"][0])
    k = proj(key,   params["w_qkv"][1], params["b_qkv"][1])
    v = proj(value, params["w_qkv"][2], params["b_qkv"][2])
    scores = jnp.einsum("bhqd,bhkd->bhqk", q, k) / math.sqrt(d_k)
    p = jax.nn.softmax(scores, axis=-1)
    x = jnp.einsum("bhqk,bhkd->bhqd", p, v)
    x = x.transpose(0, 2, 1, 3).reshape(B * S, d_model)
    return (x @ params["wo"] + params["bo"]).reshape(B, S, d_model)


# --------------------------------- main ---------------------------------------

if __name__ == "__main__":
    B, S, d_model, h = 2, 8, 32, 4

    root = jax.random.PRNGKey(0)
    kq, kk, kv, kp = jax.random.split(root, 4)
    query = jax.random.normal(kq, (B, S, d_model), jnp.float32)
    key_ = jax.random.normal(kk, (B, S, d_model), jnp.float32)
    value = jax.random.normal(kv, (B, S, d_model), jnp.float32)
    params = init_params(kp, d_model)

    ref = reference(query, key_, value, params, h)

    # f32 compute path: tight check of the kernel math.
    mha_f32 = jax.jit(functools.partial(multi_head_attention, h=h,
                                        compute_dtype=jnp.float32))
    out_f32 = jax.block_until_ready(mha_f32(query, key_, value, params))
    assert out_f32.shape == (B, S, d_model)
    assert jnp.allclose(out_f32, ref, atol=2e-3, rtol=2e-3), "f32 mismatch vs reference"

    # bf16 compute path (production config: bf16 MXU operands, f32 accumulation).
    mha_bf16 = jax.jit(functools.partial(multi_head_attention, h=h,
                                         compute_dtype=jnp.bfloat16))
    out_bf16 = jax.block_until_ready(mha_bf16(query, key_, value, params))
    assert out_bf16.shape == (B, S, d_model)
    assert jnp.allclose(out_bf16, ref, atol=8e-2, rtol=8e-2), "bf16 mismatch vs reference"

    print("KERNEL_OK")
</pallas_src>

<mosaic_0001>
module attributes {stable_mosaic.version = 11 : i64} {
  func.func @_linear_kernel(%arg0: i32, %arg1: i32, %arg2: i32, %arg3: memref<16x32xf32, #tpu.memory_space<vmem>>, %arg4: memref<32x32xf32, #tpu.memory_space<vmem>>, %arg5: memref<1x32xf32, #tpu.memory_space<vmem>>, %arg6: memref<16x32xf32, #tpu.memory_space<vmem>>, %arg7: memref<16x32xf32, #tpu.memory_space<vmem>>) attributes {dimension_semantics = [#tpu.dimension_semantics<parallel>, #tpu.dimension_semantics<parallel>, #tpu.dimension_semantics<arbitrary>], iteration_bounds = array<i64: 1, 1, 1>, scalar_prefetch = 0 : i64, scratch_operands = 1 : i64, tpu.core_type = #tpu.core_type<tc>, window_params = [{transform_indices = @transform_0, window_bounds = array<i64: 16, 32>}, {transform_indices = @transform_1, window_bounds = array<i64: 32, 32>}, {transform_indices = @transform_2, window_bounds = array<i64: 1, 32>}, {transform_indices = @transform_3, window_bounds = array<i64: 16, 32>}]} {
    %c0_i32 = arith.constant 0 : i32
    %0 = arith.cmpi eq, %arg2, %c0_i32 : i32
    %1 = arith.extui %0 : i1 to i32
    %c0_i32_0 = arith.constant 0 : i32
    %2 = arith.cmpi ne, %1, %c0_i32_0 : i32
    scf.if %2 {
      %cst_10 = arith.constant 0.000000e+00 : f32
      %12 = vector.broadcast %cst_10 : f32 to vector<16x32xf32>
      %c0_11 = arith.constant 0 : index
      %c0_12 = arith.constant 0 : index
      %13 = vector.load %arg7[%c0_11, %c0_12] : memref<16x32xf32, #tpu.memory_space<vmem>>, vector<16x32xf32>
      tpu.vector_store %arg7[%c0_11, %c0_12], %12 {strides = array<i32>} : memref<16x32xf32, #tpu.memory_space<vmem>>, vector<16x32xf32>,
    } else {
    }
    %c0 = arith.constant 0 : index
    %c0_1 = arith.constant 0 : index
    %3 = vector.load %arg7[%c0, %c0_1] : memref<16x32xf32, #tpu.memory_space<vmem>>, vector<16x32xf32>
    %c0_2 = arith.constant 0 : index
    %c0_3 = arith.constant 0 : index
    %4 = vector.load %arg3[%c0_2, %c0_3] : memref<16x32xf32, #tpu.memory_space<vmem>>, vector<16x32xf32>
    %c0_4 = arith.constant 0 : index
    %c0_5 = arith.constant 0 : index
    %5 = vector.load %arg4[%c0_4, %c0_5] : memref<32x32xf32, #tpu.memory_space<vmem>>, vector<32x32xf32>
    %cst = arith.constant dense<0.000000e+00> : vector<16x32xf32>
    %6 = tpu.matmul %4, %5, %cst {dimension_numbers = #tpu.dot_dimension_numbers<[1], [0], [0], [1], [0, 0, 1, 1], [], []>} : vector<16x32xf32>, vector<32x32xf32>, vector<16x32xf32> -> vector<16x32xf32>
    %7 = arith.addf %3, %6 : vector<16x32xf32>
    %c0_6 = arith.constant 0 : index
    %c0_7 = arith.constant 0 : index
    %8 = vector.load %arg7[%c0_6, %c0_7] : memref<16x32xf32, #tpu.memory_space<vmem>>, vector<16x32xf32>
    tpu.vector_store %arg7[%c0_6, %c0_7], %7 {strides = array<i32>} : memref<16x32xf32, #tpu.memory_space<vmem>>, vector<16x32xf32>,
    %c0_i32_8 = arith.constant 0 : i32
    %9 = arith.cmpi eq, %arg2, %c0_i32_8 : i32
    %10 = arith.extui %9 : i1 to i32
    %c0_i32_9 = arith.constant 0 : i32
    %11 = arith.cmpi ne, %10, %c0_i32_9 : i32
    scf.if %11 {
      %c0_10 = arith.constant 0 : index
      %c0_11 = arith.constant 0 : index
      %12 = vector.load %arg7[%c0_10, %c0_11] : memref<16x32xf32, #tpu.memory_space<vmem>>, vector<16x32xf32>
      %c0_12 = arith.constant 0 : index
      %c0_13 = arith.constant 0 : index
      %13 = vector.load %arg5[%c0_12, %c0_13] : memref<1x32xf32, #tpu.memory_space<vmem>>, vector<1x32xf32>
      %14 = vector.broadcast %13 : vector<1x32xf32> to vector<16x32xf32>
      %15 = arith.addf %12, %14 : vector<16x32xf32>
      %c0_14 = arith.constant 0 : index
      %c0_15 = arith.constant 0 : index
      %16 = vector.load %arg6[%c0_14, %c0_15] : memref<16x32xf32, #tpu.memory_space<vmem>>, vector<16x32xf32>
      tpu.vector_store %arg6[%c0_14, %c0_15], %15 {strides = array<i32>} : memref<16x32xf32, #tpu.memory_space<vmem>>, vector<16x32xf32>,
    } else {
    }
    return
  }
  func.func @transform_0(%arg0: i32, %arg1: i32, %arg2: i32) -> (i32, i32) {
    %c0_i32 = arith.constant 0 : i32
    return %arg0, %arg2 : i32, i32
  }
  func.func @transform_1(%arg0: i32, %arg1: i32, %arg2: i32) -> (i32, i32) {
    %c0_i32 = arith.constant 0 : i32
    return %arg2, %arg1 : i32, i32
  }
  func.func @transform_2(%arg0: i32, %arg1: i32, %arg2: i32) -> (i32, i32) {
    %c0_i32 = arith.constant 0 : i32
    %c0_i32_0 = arith.constant 0 : i32
    return %c0_i32, %arg1 : i32, i32
  }
  func.func @transform_3(%arg0: i32, %arg1: i32, %arg2: i32) -> (i32, i32) {
    %c0_i32 = arith.constant 0 : i32
    return %arg0, %arg1 : i32, i32
  }
}

module attributes {stable_mosaic.version = 11 : i64} {
  func.func @_attn_kernel(%arg0: i32, %arg1: i32, %arg2: memref<1x8x32xf32, #tpu.memory_space<vmem>>, %arg3: memref<1x8x32xf32, #tpu.memory_space<vmem>>, %arg4: memref<1x8x32xf32, #tpu.memory_space<vmem>>, %arg5: memref<1x8x32xf32, #tpu.memory_space<vmem>>) attributes {dimension_semantics = [#tpu.dimension_semantics<parallel>, #tpu.dimension_semantics<parallel>], iteration_bounds = array<i64: 2, 1>, scalar_prefetch = 0 : i64, scratch_operands = 0 : i64, tpu.core_type = #tpu.core_type<tc>, window_params = [{transform_indices = @transform_0, window_bounds = array<i64: 1, 8, 32>}, {transform_indices = @transform_1, window_bounds = array<i64: 1, 8, 32>}, {transform_indices = @transform_2, window_bounds = array<i64: 1, 8, 32>}, {transform_indices = @transform_3, window_bounds = array<i64: 1, 8, 32>}]} {
    %c0 = arith.constant 0 : index
    %c0_0 = arith.constant 0 : index
    %c0_1 = arith.constant 0 : index
    %0 = vector.load %arg2[%c0, %c0_0, %c0_1] : memref<1x8x32xf32, #tpu.memory_space<vmem>>, vector<1x8x32xf32>
    %1 = vector.shape_cast %0 : vector<1x8x32xf32> to vector<8x32xf32>
    %c0_2 = arith.constant 0 : index
    %c0_3 = arith.constant 0 : index
    %c0_4 = arith.constant 0 : index
    %2 = vector.load %arg3[%c0_2, %c0_3, %c0_4] : memref<1x8x32xf32, #tpu.memory_space<vmem>>, vector<1x8x32xf32>
    %3 = vector.shape_cast %2 : vector<1x8x32xf32> to vector<8x32xf32>
    %c0_5 = arith.constant 0 : index
    %c0_6 = arith.constant 0 : index
    %c0_7 = arith.constant 0 : index
    %4 = vector.load %arg4[%c0_5, %c0_6, %c0_7] : memref<1x8x32xf32, #tpu.memory_space<vmem>>, vector<1x8x32xf32>
    %5 = vector.shape_cast %4 : vector<1x8x32xf32> to vector<8x32xf32>
    %6 = vector.extract_strided_slice %1 {offsets = [0, 0], sizes = [8, 8], strides = [1, 1]} : vector<8x32xf32> to vector<8x8xf32>
    %cst = arith.constant 0.353553385 : f32
    %7 = vector.broadcast %cst : f32 to vector<8x8xf32>
    %8 = arith.mulf %6, %7 : vector<8x8xf32>
    %9 = vector.extract_strided_slice %3 {offsets = [0, 0], sizes = [8, 8], strides = [1, 1]} : vector<8x32xf32> to vector<8x8xf32>
    %10 = vector.extract_strided_slice %5 {offsets = [0, 0], sizes = [8, 8], strides = [1, 1]} : vector<8x32xf32> to vector<8x8xf32>
    %cst_8 = arith.constant dense<0.000000e+00> : vector<8x8xf32>
    %11 = tpu.matmul %8, %9, %cst_8 {dimension_numbers = #tpu.dot_dimension_numbers<[1], [1], [0], [0], [0, 0, 1, 0], [], []>} : vector<8x8xf32>, vector<8x8xf32>, vector<8x8xf32> -> vector<8x8xf32>
    %cst_9 = arith.constant dense<0xFF800000> : vector<8xf32>
    %12 = vector.multi_reduction <maximumf>, %11, %cst_9 [1] : vector<8x8xf32> to vector<8xf32>
    %13 = vector.shape_cast %12 : vector<8xf32> to vector<8x1xf32>
    %14 = vector.broadcast %13 : vector<8x1xf32> to vector<8x8xf32>
    %15 = arith.subf %11, %14 : vector<8x8xf32>
    %16 = math.exp %15 : vector<8x8xf32>
    %cst_10 = arith.constant dense<0.000000e+00> : vector<8xf32>
    %17 = vector.multi_reduction <add>, %16, %cst_10 [1] : vector<8x8xf32> to vector<8xf32>
    %18 = vector.shape_cast %17 : vector<8xf32> to vector<8x1xf32>
    %cst_11 = arith.constant dense<0.000000e+00> : vector<8x8xf32>
    %19 = tpu.matmul %16, %10, %cst_11 {dimension_numbers = #tpu.dot_dimension_numbers<[1], [0], [0], [1], [0, 0, 1, 1], [], []>} : vector<8x8xf32>, vector<8x8xf32>, vector<8x8xf32> -> vector<8x8xf32>
    %20 = tpu.reciprocal %18 {approx = true} : vector<8x1xf32> -> vector<8x1xf32>
    %21 = vector.broadcast %20 : vector<8x1xf32> to vector<8x8xf32>
    %22 = arith.mulf %19, %21 : vector<8x8xf32>
    %23 = vector.extract_strided_slice %1 {offsets = [0, 8], sizes = [8, 8], strides = [1, 1]} : vector<8x32xf32> to vector<8x8xf32>
    %cst_12 = arith.constant 0.353553385 : f32
    %24 = vector.broadcast %cst_12 : f32 to vector<8x8xf32>
    %25 = arith.mulf %23, %24 : vector<8x8xf32>
    %26 = vector.extract_strided_slice %3 {offsets = [0, 8], sizes = [8, 8], strides = [1, 1]} : vector<8x32xf32> to vector<8x8xf32>
    %27 = vector.extract_strided_slice %5 {offsets = [0, 8], sizes = [8, 8], strides = [1, 1]} : vector<8x32xf32> to vector<8x8xf32>
    %cst_13 = arith.constant dense<0.000000e+00> : vector<8x8xf32>
    %28 = tpu.matmul %25, %26, %cst_13 {dimension_numbers = #tpu.dot_dimension_numbers<[1], [1], [0], [0], [0, 0, 1, 0], [], []>} : vector<8x8xf32>, vector<8x8xf32>, vector<8x8xf32> -> vector<8x8xf32>
    %cst_14 = arith.constant dense<0xFF800000> : vector<8xf32>
    %29 = vector.multi_reduction <maximumf>, %28, %cst_14 [1] : vector<8x8xf32> to vector<8xf32>
    %30 = vector.shape_cast %29 : vector<8xf32> to vector<8x1xf32>
    %31 = vector.broadcast %30 : vector<8x1xf32> to vector<8x8xf32>
    %32 = arith.subf %28, %31 : vector<8x8xf32>
    %33 = math.exp %32 : vector<8x8xf32>
    %cst_15 = arith.constant dense<0.000000e+00> : vector<8xf32>
    %34 = vector.multi_reduction <add>, %33, %cst_15 [1] : vector<8x8xf32> to vector<8xf32>
    %35 = vector.shape_cast %34 : vector<8xf32> to vector<8x1xf32>
    %cst_16 = arith.constant dense<0.000000e+00> : vector<8x8xf32>
    %36 = tpu.matmul %33, %27, %cst_16 {dimension_numbers = #tpu.dot_dimension_numbers<[1], [0], [0], [1], [0, 0, 1, 1], [], []>} : vector<8x8xf32>, vector<8x8xf32>, vector<8x8xf32> -> vector<8x8xf32>
    %37 = tpu.reciprocal %35 {approx = true} : vector<8x1xf32> -> vector<8x1xf32>
    %38 = vector.broadcast %37 : vector<8x1xf32> to vector<8x8xf32>
    %39 = arith.mulf %36, %38 : vector<8x8xf32>
    %40 = vector.extract_strided_slice %1 {offsets = [0, 16], sizes = [8, 8], strides = [1, 1]} : vector<8x32xf32> to vector<8x8xf32>
    %cst_17 = arith.constant 0.353553385 : f32
    %41 = vector.broadcast %cst_17 : f32 to vector<8x8xf32>
    %42 = arith.mulf %40, %41 : vector<8x8xf32>
    %43 = vector.extract_strided_slice %3 {offsets = [0, 16], sizes = [8, 8], strides = [1, 1]} : vector<8x32xf32> to vector<8x8xf32>
    %44 = vector.extract_strided_slice %5 {offsets = [0, 16], sizes = [8, 8], strides = [1, 1]} : vector<8x32xf32> to vector<8x8xf32>
    %cst_18 = arith.constant dense<0.000000e+00> : vector<8x8xf32>
    %45 = tpu.matmul %42, %43, %cst_18 {dimension_numbers = #tpu.dot_dimension_numbers<[1], [1], [0], [0], [0, 0, 1, 0], [], []>} : vector<8x8xf32>, vector<8x8xf32>, vector<8x8xf32> -> vector<8x8xf32>
    %cst_19 = arith.constant dense<0xFF800000> : vector<8xf32>
    %46 = vector.multi_reduction <maximumf>, %45, %cst_19 [1] : vector<8x8xf32> to vector<8xf32>
    %47 = vector.shape_cast %46 : vector<8xf32> to vector<8x1xf32>
    %48 = vector.broadcast %47 : vector<8x1xf32> to vector<8x8xf32>
    %49 = arith.subf %45, %48 : vector<8x8xf32>
    %50 = math.exp %49 : vector<8x8xf32>
    %cst_20 = arith.constant dense<0.000000e+00> : vector<8xf32>
    %51 = vector.multi_reduction <add>, %50, %cst_20 [1] : vector<8x8xf32> to vector<8xf32>
    %52 = vector.shape_cast %51 : vector<8xf32> to vector<8x1xf32>
    %cst_21 = arith.constant dense<0.000000e+00> : vector<8x8xf32>
    %53 = tpu.matmul %50, %44, %cst_21 {dimension_numbers = #tpu.dot_dimension_numbers<[1], [0], [0], [1], [0, 0, 1, 1], [], []>} : vector<8x8xf32>, vector<8x8xf32>, vector<8x8xf32> -> vector<8x8xf32>
    %54 = tpu.reciprocal %52 {approx = true} : vector<8x1xf32> -> vector<8x1xf32>
    %55 = vector.broadcast %54 : vector<8x1xf32> to vector<8x8xf32>
    %56 = arith.mulf %53, %55 : vector<8x8xf32>
    %57 = vector.extract_strided_slice %1 {offsets = [0, 24], sizes = [8, 8], strides = [1, 1]} : vector<8x32xf32> to vector<8x8xf32>
    %cst_22 = arith.constant 0.353553385 : f32
    %58 = vector.broadcast %cst_22 : f32 to vector<8x8xf32>
    %59 = arith.mulf %57, %58 : vector<8x8xf32>
    %60 = vector.extract_strided_slice %3 {offsets = [0, 24], sizes = [8, 8], strides = [1, 1]} : vector<8x32xf32> to vector<8x8xf32>
    %61 = vector.extract_strided_slice %5 {offsets = [0, 24], sizes = [8, 8], strides = [1, 1]} : vector<8x32xf32> to vector<8x8xf32>
    %cst_23 = arith.constant dense<0.000000e+00> : vector<8x8xf32>
    %62 = tpu.matmul %59, %60, %cst_23 {dimension_numbers = #tpu.dot_dimension_numbers<[1], [1], [0], [0], [0, 0, 1, 0], [], []>} : vector<8x8xf32>, vector<8x8xf32>, vector<8x8xf32> -> vector<8x8xf32>
    %cst_24 = arith.constant dense<0xFF800000> : vector<8xf32>
    %63 = vector.multi_reduction <maximumf>, %62, %cst_24 [1] : vector<8x8xf32> to vector<8xf32>
    %64 = vector.shape_cast %63 : vector<8xf32> to vector<8x1xf32>
    %65 = vector.broadcast %64 : vector<8x1xf32> to vector<8x8xf32>
    %66 = arith.subf %62, %65 : vector<8x8xf32>
    %67 = math.exp %66 : vector<8x8xf32>
    %cst_25 = arith.constant dense<0.000000e+00> : vector<8xf32>
    %68 = vector.multi_reduction <add>, %67, %cst_25 [1] : vector<8x8xf32> to vector<8xf32>
    %69 = vector.shape_cast %68 : vector<8xf32> to vector<8x1xf32>
    %cst_26 = arith.constant dense<0.000000e+00> : vector<8x8xf32>
    %70 = tpu.matmul %67, %61, %cst_26 {dimension_numbers = #tpu.dot_dimension_numbers<[1], [0], [0], [1], [0, 0, 1, 1], [], []>} : vector<8x8xf32>, vector<8x8xf32>, vector<8x8xf32> -> vector<8x8xf32>
    %71 = tpu.reciprocal %69 {approx = true} : vector<8x1xf32> -> vector<8x1xf32>
    %72 = vector.broadcast %71 : vector<8x1xf32> to vector<8x8xf32>
    %73 = arith.mulf %70, %72 : vector<8x8xf32>
    %74 = tpu.concatenate %22, %39, %56, %73 in 1 : vector<8x8xf32>, vector<8x8xf32>, vector<8x8xf32>, vector<8x8xf32> -> vector<8x32xf32>
    %c0_27 = arith.constant 0 : index
    %c0_28 = arith.constant 0 : index
    %c0_29 = arith.constant 0 : index
    %75 = vector.load %arg5[%c0_27, %c0_28, %c0_29] : memref<1x8x32xf32, #tpu.memory_space<vmem>>, vector<1x8x32xf32>
    %76 = vector.shape_cast %75 : vector<1x8x32xf32> to vector<8x32xf32>
    %77 = vector.shape_cast %74 : vector<8x32xf32> to vector<1x8x32xf32>
    tpu.vector_store %arg5[%c0_27, %c0_28, %c0_29], %77 {strides = array<i32>} : memref<1x8x32xf32, #tpu.memory_space<vmem>>, vector<1x8x32xf32>,
    return
  }
  func.func @transform_0(%arg0: i32, %arg1: i32) -> (i32, i32, i32) {
    %c0_i32 = arith.constant 0 : i32
    %c0_i32_0 = arith.constant 0 : i32
    return %arg0, %arg1, %c0_i32 : i32, i32, i32
  }
  func.func @transform_1(%arg0: i32, %arg1: i32) -> (i32, i32, i32) {
    %c0_i32 = arith.constant 0 : i32
    %c0_i32_0 = arith.constant 0 : i32
    %c0_i32_1 = arith.constant 0 : i32
    return %arg0, %c0_i32, %c0_i32_0 : i32, i32, i32
  }
  func.func @transform_2(%arg0: i32, %arg1: i32) -> (i32, i32, i32) {
    %c0_i32 = arith.constant 0 : i32
    %c0_i32_0 = arith.constant 0 : i32
    %c0_i32_1 = arith.constant 0 : i32
    return %arg0, %c0_i32, %c0_i32_0 : i32, i32, i32
  }
  func.func @transform_3(%arg0: i32, %arg1: i32) -> (i32, i32, i32) {
    %c0_i32 = arith.constant 0 : i32
    %c0_i32_0 = arith.constant 0 : i32
    return %arg0, %arg1, %c0_i32 : i32, i32, i32
  }
}

module attributes {stable_mosaic.version = 11 : i64} {
  func.func @_linear_kernel(%arg0: i32, %arg1: i32, %arg2: i32, %arg3: memref<16x32xf32, #tpu.memory_space<vmem>>, %arg4: memref<32x32xf32, #tpu.memory_space<vmem>>, %arg5: memref<1x32xf32, #tpu.memory_space<vmem>>, %arg6: memref<16x32xf32, #tpu.memory_space<vmem>>, %arg7: memref<16x32xf32, #tpu.memory_space<vmem>>) attributes {dimension_semantics = [#tpu.dimension_semantics<parallel>, #tpu.dimension_semantics<parallel>, #tpu.dimension_semantics<arbitrary>], iteration_bounds = array<i64: 1, 1, 1>, scalar_prefetch = 0 : i64, scratch_operands = 1 : i64, tpu.core_type = #tpu.core_type<tc>, window_params = [{transform_indices = @transform_0, window_bounds = array<i64: 16, 32>}, {transform_indices = @transform_1, window_bounds = array<i64: 32, 32>}, {transform_indices = @transform_2, window_bounds = array<i64: 1, 32>}, {transform_indices = @transform_3, window_bounds = array<i64: 16, 32>}]} {
    %c0_i32 = arith.constant 0 : i32
    %0 = arith.cmpi eq, %arg2, %c0_i32 : i32
    %1 = arith.extui %0 : i1 to i32
    %c0_i32_0 = arith.constant 0 : i32
    %2 = arith.cmpi ne, %1, %c0_i32_0 : i32
    scf.if %2 {
      %cst_10 = arith.constant 0.000000e+00 : f32
      %12 = vector.broadcast %cst_10 : f32 to vector<16x32xf32>
      %c0_11 = arith.constant 0 : index
      %c0_12 = arith.constant 0 : index
      %13 = vector.load %arg7[%c0_11, %c0_12] : memref<16x32xf32, #tpu.memory_space<vmem>>, vector<16x32xf32>
      tpu.vector_store %arg7[%c0_11, %c0_12], %12 {strides = array<i32>} : memref<16x32xf32, #tpu.memory_space<vmem>>, vector<16x32xf32>,
    } else {
    }
    %c0 = arith.constant 0 : index
    %c0_1 = arith.constant 0 : index
    %3 = vector.load %arg7[%c0, %c0_1] : memref<16x32xf32, #tpu.memory_space<vmem>>, vector<16x32xf32>
    %c0_2 = arith.constant 0 : index
    %c0_3 = arith.constant 0 : index
    %4 = vector.load %arg3[%c0_2, %c0_3] : memref<16x32xf32, #tpu.memory_space<vmem>>, vector<16x32xf32>
    %c0_4 = arith.constant 0 : index
    %c0_5 = arith.constant 0 : index
    %5 = vector.load %arg4[%c0_4, %c0_5] : memref<32x32xf32, #tpu.memory_space<vmem>>, vector<32x32xf32>
    %cst = arith.constant dense<0.000000e+00> : vector<16x32xf32>
    %6 = tpu.matmul %4, %5, %cst {dimension_numbers = #tpu.dot_dimension_numbers<[1], [0], [0], [1], [0, 0, 1, 1], [], []>} : vector<16x32xf32>, vector<32x32xf32>, vector<16x32xf32> -> vector<16x32xf32>
    %7 = arith.addf %3, %6 : vector<16x32xf32>
    %c0_6 = arith.constant 0 : index
    %c0_7 = arith.constant 0 : index
    %8 = vector.load %arg7[%c0_6, %c0_7] : memref<16x32xf32, #tpu.memory_space<vmem>>, vector<16x32xf32>
    tpu.vector_store %arg7[%c0_6, %c0_7], %7 {strides = array<i32>} : memref<16x32xf32, #tpu.memory_space<vmem>>, vector<16x32xf32>,
    %c0_i32_8 = arith.constant 0 : i32
    %9 = arith.cmpi eq, %arg2, %c0_i32_8 : i32
    %10 = arith.extui %9 : i1 to i32
    %c0_i32_9 = arith.constant 0 : i32
    %11 = arith.cmpi ne, %10, %c0_i32_9 : i32
    scf.if %11 {
      %c0_10 = arith.constant 0 : index
      %c0_11 = arith.constant 0 : index
      %12 = vector.load %arg7[%c0_10, %c0_11] : memref<16x32xf32, #tpu.memory_space<vmem>>, vector<16x32xf32>
      %c0_12 = arith.constant 0 : index
      %c0_13 = arith.constant 0 : index
      %13 = vector.load %arg5[%c0_12, %c0_13] : memref<1x32xf32, #tpu.memory_space<vmem>>, vector<1x32xf32>
      %14 = vector.broadcast %13 : vector<1x32xf32> to vector<16x32xf32>
      %15 = arith.addf %12, %14 : vector<16x32xf32>
      %c0_14 = arith.constant 0 : index
      %c0_15 = arith.constant 0 : index
      %16 = vector.load %arg6[%c0_14, %c0_15] : memref<16x32xf32, #tpu.memory_space<vmem>>, vector<16x32xf32>
      tpu.vector_store %arg6[%c0_14, %c0_15], %15 {strides = array<i32>} : memref<16x32xf32, #tpu.memory_space<vmem>>, vector<16x32xf32>,
    } else {
    }
    return
  }
  func.func @transform_0(%arg0: i32, %arg1: i32, %arg2: i32) -> (i32, i32) {
    %c0_i32 = arith.constant 0 : i32
    return %arg0, %arg2 : i32, i32
  }
  func.func @transform_1(%arg0: i32, %arg1: i32, %arg2: i32) -> (i32, i32) {
    %c0_i32 = arith.constant 0 : i32
    return %arg2, %arg1 : i32, i32
  }
  func.func @transform_2(%arg0: i32, %arg1: i32, %arg2: i32) -> (i32, i32) {
    %c0_i32 = arith.constant 0 : i32
    %c0_i32_0 = arith.constant 0 : i32
    return %c0_i32, %arg1 : i32, i32
  }
  func.func @transform_3(%arg0: i32, %arg1: i32, %arg2: i32) -> (i32, i32) {
    %c0_i32 = arith.constant 0 : i32
    return %arg0, %arg1 : i32, i32
  }
}

</mosaic_0001>

<llo_original>
// kernel: multi_head_attention.9
$region0: #{multi_head_attention.9}
  #allocation0 [shape = 'u32[]', space=smem, size = 0x4, offset = 0x4, fixed_abs, tag = 'smem constant byte address 0x4 - core index']
  #allocation1 [shape = 'u32[144,128]{1,0:T(1,128)}', space=vmem, size = 0x12000, scoped, tag = 'internal scratch']
  #allocation2 [shape = 'f32[16,32]{1,0:T(8,128)}', space=vmem, size = 0x2000, scoped, tag = 'scratch operand']
  %s0 = inlined_call_operand.hbm [shape: f32[16,32], index: 0, kind: input, shape index: {}]
  %s1 = inlined_call_operand.hbm [shape: f32[32,32], index: 1, kind: input, shape index: {}]
  %s2 = inlined_call_operand.vmem [shape: f32[1,32], index: 2, kind: input, shape index: {}]
  %s3 = inlined_call_operand.hbm [shape: f32[16,32], index: 3, kind: output, shape index: {}]
  %s4 = sld [smem:[#allocation0]]
  $region38: #{multi_head_attention.9} parent=0
    _
  %s6 = ssub.s32 1, %s4
  %s7 = scalar_select 0, %s6, %s4
  $region1: #{multi_head_attention.9} parent=0
    #allocation3 [shape = 'u8[8192]{0}', space=vmem, size = 0x2000, scoped, tag = 'input window, operand 0, single buffered']
    #allocation4 [shape = 's32[1]{0}', space=sflag, size = 0x4, scoped, tag = 'scoped memory for multi_head_attention.9']
    #allocation5 [shape = 's32[1]{0}', space=sflag, size = 0x4, scoped, tag = 'scoped memory for multi_head_attention.9']
    #allocation6 [shape = 'u8[16384]{0}', space=vmem, size = 0x4000, scoped, tag = 'input window, operand 1, single buffered']
    #allocation7 [shape = 's32[1]{0}', space=sflag, size = 0x4, scoped, tag = 'scoped memory for multi_head_attention.9']
    #allocation8 [shape = 'u8[8192]{0}', space=vmem, size = 0x2000, scoped, tag = 'output window, operand 0, single buffered']
    %8 = vsyncpa [#allocation4], 0
    %9 = vsyncpa [#allocation7], 0
    %10 = vsyncpa [#allocation5], 0
    // Predicated region
    $region2: #{multi_head_attention.9} parent=1 // pred_check
      _
    $region3: #{multi_head_attention.9} parent=1 // pred_check_branch
      %12 = sbr.rel (0) target = $region5
    $region4: #{multi_head_attention.9} parent=1 // pred_region
      %s14 = ssub.s32 256, 256
      %15 = vsyncadd [#allocation4], %s14
      %s16 = sshll.u32 [#allocation3], 4
      %s17 = int_to_ptr.vmem [resolvable:$true] %s16
      %22 = dma.hbm_to_vmem [thread:$0]  %s0, 256, %s17, [#allocation4], 128, 128, 8
    $region5: #{multi_head_attention.9} parent=1 // pred_fallthru
      _
    // Predicated region
    $region6: #{multi_head_attention.9} parent=1 // pred_check
      _
    $region7: #{multi_head_attention.9} parent=1 // pred_check_branch
      %24 = sbr.rel (0) target = $region9
    $region8: #{multi_head_attention.9} parent=1 // pred_region
      %s26 = ssub.s32 512, 512
      %27 = vsyncadd [#allocation7], %s26
      %s28 = sshll.u32 [#allocation6], 4
      %s29 = int_to_ptr.vmem [resolvable:$true] %s28
      %34 = dma.hbm_to_vmem [thread:$0]  %s1, 512, %s29, [#allocation7], 128, 128, 8
    $region9: #{multi_head_attention.9} parent=1 // pred_fallthru
      _
    // Predicated region
    $region10: #{multi_head_attention.9} parent=1 // pred_check
      _
    $region11: #{multi_head_attention.9} parent=1 // pred_check_branch
      %36 = sbr.rel (0) target = $region13
    $region12: #{multi_head_attention.9} parent=1 // pred_region
      _
    $region13: #{multi_head_attention.9} parent=1 // pred_fallthru
      _
    // Predicated region
    $region14: #{multi_head_attention.9} parent=1 // pred_check
      _
    $region15: #{multi_head_attention.9} parent=1 // pred_check_branch
      %38 = sbr.rel (0) target = $region17
    $region16: #{multi_head_attention.9} parent=1 // pred_region
      %39 = dma.done [#allocation4], 256
    $region17: #{multi_head_attention.9} parent=1 // pred_fallthru
      _
    // Predicated region
    $region18: #{multi_head_attention.9} parent=1 // pred_check
      _
    $region19: #{multi_head_attention.9} parent=1 // pred_check_branch
      %41 = sbr.rel (0) target = $region21
    $region20: #{multi_head_attention.9} parent=1 // pred_region
      %42 = dma.done [#allocation7], 512
    $region21: #{multi_head_attention.9} parent=1 // pred_fallthru
      _
    %p43 = scmp.eq.s32.totalorder 0, 0
    // Predicated region
    $region22: #{multi_head_attention.9} parent=1 // pred_check
      %p44 = pneg %p43
    $region23: #{multi_head_attention.9} parent=1 // pred_check_branch
      %46 = sbr.rel (%p44) target = $region25
    $region24: #{multi_head_attention.9} parent=1 // pred_region
      %vm47 = vcmask 261120
      %48 = vst.msk [vmem:[#allocation2] sm:$0xff] %vm47, 0.0
      %49 = vst.msk [vmem:[#allocation2 + $0x8] sm:$0xff] %vm47, 0.0
    $region25: #{multi_head_attention.9} parent=1 // pred_fallthru
      _
    %v50 = vld [vmem:[#allocation2] sm:$0xff]
    %v51 = vld [vmem:[#allocation2 + $0x8] sm:$0xff]
    %v52 = vld [vmem:[#allocation3] sm:$0xff]
    %v53 = vld [vmem:[#allocation3 + $0x8] sm:$0xff]
    %v54 = vld [vmem:[#allocation6] sm:$0xff]
    %v55 = vld [vmem:[#allocation6 + $0x8] sm:$0xff]
    %v56 = vld [vmem:[#allocation6 + $0x10] sm:$0xff]
    %v57 = vld [vmem:[#allocation6 + $0x18] sm:$0xff]
    %vm58 = vcmask 261120
    %v60 = vsel %vm58, %v52, 0
    %v63 = vsel %vm58, %v53, 0
    %65 = vmatprep.subr.mxu0 0.0
    %66 = vmatpush1.msra.mxu0 %v54
    %67 = vmatprep.subr.mxu0 0.0
    %68 = vmatpush1.msra.mxu0 %v55
    %69 = vmatprep.subr.mxu0 0.0
    %70 = vmatpush1.msra.mxu0 %v56
    %71 = vmatprep.subr.mxu0 0.0
    %72 = vmatpush1.msra.mxu0 %v57
    %73 = vmatprep.subr.mxu0 0.0
    %74 = vmatpush1.msra.mxu0 0.0
    %75 = vmatprep.subr.mxu0 0.0
    %76 = vmatpush1.msra.mxu0 0.0
    %77 = vmatprep.subr.mxu0 0.0
    %78 = vmatpush1.msra.mxu0 0.0
    %79 = vmatprep.subr.mxu0 0.0
    %80 = vmatpush1.msra.mxu0 0.0
    %81 = vmatprep.subr.mxu0 0.0
    %82 = vmatpush1.msra.mxu0 0.0
    %83 = vmatprep.subr.mxu0 0.0
    %84 = vmatpush1.msra.mxu0 0.0
    %85 = vmatprep.subr.mxu0 0.0
    %86 = vmatpush1.msra.mxu0 0.0
    %87 = vmatprep.subr.mxu0 0.0
    %88 = vmatpush1.msra.mxu0 0.0
    %89 = vmatprep.subr.mxu0 0.0
    %90 = vmatpush1.msra.mxu0 0.0
    %91 = vmatprep.subr.mxu0 0.0
    %92 = vmatpush1.msra.mxu0 0.0
    %93 = vmatprep.subr.mxu0 0.0
    %94 = vmatpush1.msra.mxu0 0.0
    %95 = vmatprep.subr.mxu0 0.0
    %96 = vmatpush1.msra.mxu0 0.0
    %97 = vmatprep.subr.mxu0 0.0
    %98 = vmatpush1.msra.mxu0 0.0
    %99 = vmatprep.subr.mxu0 0.0
    %100 = vmatpush1.msra.mxu0 0.0
    %101 = vmatprep.subr.mxu0 0.0
    %102 = vmatpush1.msra.mxu0 0.0
    %103 = vmatprep.subr.mxu0 0.0
    %104 = vmatpush1.msra.mxu0 0.0
    %105 = vmatprep.subr.mxu0 0.0
    %106 = vmatpush1.msra.mxu0 0.0
    %107 = vmatprep.subr.mxu0 0.0
    %108 = vmatpush1.msra.mxu0 0.0
    %109 = vmatprep.subr.mxu0 0.0
    %110 = vmatpush1.msra.mxu0 0.0
    %111 = vmatprep.subr.mxu0 0.0
    %112 = vmatpush1.msra.mxu0 0.0
    %113 = vmatprep.subr.mxu0 0.0
    %114 = vmatpush1.msra.mxu0 0.0
    %115 = vmatprep.subr.mxu0 0.0
    %116 = vmatpush1.msra.mxu0 0.0
    %117 = vmatprep.subr.mxu0 0.0
    %118 = vmatpush1.msra.mxu0 0.0
    %119 = vmatprep.subr.mxu0 0.0
    %120 = vmatpush1.msra.mxu0 0.0
    %121 = vmatprep.subr.mxu0 0.0
    %122 = vmatpush1.msra.mxu0 0.0
    %123 = vmatprep.subr.mxu0 0.0
    %124 = vmatpush1.msra.mxu0 0.0
    %125 = vmatprep.subr.mxu0 0.0
    %126 = vmatpush1.msra.mxu0 0.0
    %127 = vmatprep.subr.mxu0 0.0
    %128 = vmatpush1.msra.mxu0 0.0
    %129 = vmatprep.mubr.f32.mxu0 0.0
    %130 = vmatmul.mubr.f32.gmra.mrb[0].mxu0 %v60
    %v131 = vpop.f32.mrb[0].mxu0
    %v132 = vadd.f32 0.0, %v131
    %v133 = vpop.f32.mrb[0].mxu0
    %134 = vmatprep.mubr.f32.mxu0 0.0
    %135 = vmatmul.mubr.f32.gmra.mrb[0].mxu0 %v63
    %v136 = vpop.f32.mrb[0].mxu0
    %v137 = vadd.f32 0.0, %v136
    %v138 = vpop.f32.mrb[0].mxu0
    %139 = vdwg.mxu0
    %v140 = vadd.f32 %v50, %v132
    %v141 = vadd.f32 %v51, %v137
    %142 = vst.msk [vmem:[#allocation2] sm:$0xff] %vm58, %v140
    %143 = vst.msk [vmem:[#allocation2 + $0x8] sm:$0xff] %vm58, %v141
    // Predicated region
    $region26: #{multi_head_attention.9} parent=1 // pred_check
      %p144 = pneg %p43
    $region27: #{multi_head_attention.9} parent=1 // pred_check_branch
      %146 = sbr.rel (%p144) target = $region29
    $region28: #{multi_head_attention.9} parent=1 // pred_region
      %v147 = vld [vmem:[#allocation2] sm:$0xff]
      %v148 = vld [vmem:[#allocation2 + $0x8] sm:$0xff]
      %v149 = vld [vmem:[%s2] sm:$0x1]
      %v151 = vlaneseq
      %v152 = vshrl.u32 %v151, 7
      %v153 = vsub.s32 0, %v152
      %v154 = vrot.slane %v149, %v153
      %v156 = vadd.f32 %v147, %v154
      %v157 = vadd.f32 %v148, %v154
      %158 = vst.msk [vmem:[#allocation8] sm:$0xff] %vm58, %v156
      %159 = vst.msk [vmem:[#allocation8 + $0x8] sm:$0xff] %vm58, %v157
    $region29: #{multi_head_attention.9} parent=1 // pred_fallthru
      _
    // Predicated region
    $region30: #{multi_head_attention.9} parent=1 // pred_check
      _
    $region31: #{multi_head_attention.9} parent=1 // pred_check_branch
      %161 = sbr.rel (0) target = $region33
    $region32: #{multi_head_attention.9} parent=1 // pred_region
      %s163 = ssub.s32 256, 256
      %164 = vsyncadd [#allocation5], %s163
      %s165 = sshll.u32 [#allocation8], 4
      %s166 = int_to_ptr.vmem [resolvable:$true] %s165
      %171 = dma.vmem_to_hbm [thread:$0]  %s166, 256, %s3, [#allocation5], 128, 128, 8
    $region33: #{multi_head_attention.9} parent=1 // pred_fallthru
      _
    // Predicated region
    $region34: #{multi_head_attention.9} parent=1 // pred_check
      _
    $region35: #{multi_head_attention.9} parent=1 // pred_check_branch
      %173 = sbr.rel (0) target = $region37
    $region36: #{multi_head_attention.9} parent=1 // pred_region
      %174 = dma.done [#allocation5], 256
    $region37: #{multi_head_attention.9} parent=1 // pred_fallthru
      _
    %175 = vsyncpa [#allocation4], 1
    %176 = vsyncpa [#allocation7], 1
    %177 = vsyncpa [#allocation5], 1

// kernel: multi_head_attention.7
$region0: #{multi_head_attention.7}
  #allocation0 [shape = 'u32[]', space=smem, size = 0x4, offset = 0x4, fixed_abs, tag = 'smem constant byte address 0x4 - core index']
  #allocation1 [shape = 'u32[144,128]{1,0:T(1,128)}', space=vmem, size = 0x12000, scoped, tag = 'internal scratch']
  #allocation2 [shape = 'f32[16,32]{1,0:T(8,128)}', space=vmem, size = 0x2000, scoped, tag = 'scratch operand']
  %s0 = inlined_call_operand.vmem [shape: f32[16,32], index: 0, kind: input, shape index: {}]
  %s1 = inlined_call_operand.vmem [shape: f32[32,32], index: 1, kind: input, shape index: {}]
  %s2 = inlined_call_operand.vmem [shape: f32[1,32], index: 2, kind: input, shape index: {}]
  %s3 = inlined_call_operand.hbm [shape: f32[16,32], index: 3, kind: output, shape index: {}]
  %s4 = sld [smem:[#allocation0]]
  $region30: #{multi_head_attention.7} parent=0
    _
  %s6 = ssub.s32 1, %s4
  %s7 = scalar_select 0, %s6, %s4
  $region1: #{multi_head_attention.7} parent=0
    #allocation3 [shape = 'u8[8192]{0}', space=vmem, size = 0x2000, scoped, tag = 'output window, operand 0, single buffered']
    #allocation4 [shape = 's32[1]{0}', space=sflag, size = 0x4, scoped, tag = 'scoped memory for multi_head_attention.7']
    %8 = vsyncpa [#allocation4], 0
    // Predicated region
    $region2: #{multi_head_attention.7} parent=1 // pred_check
      _
    $region3: #{multi_head_attention.7} parent=1 // pred_check_branch
      %10 = sbr.rel (0) target = $region5
    $region4: #{multi_head_attention.7} parent=1 // pred_region
      _
    $region5: #{multi_head_attention.7} parent=1 // pred_fallthru
      _
    // Predicated region
    $region6: #{multi_head_attention.7} parent=1 // pred_check
      _
    $region7: #{multi_head_attention.7} parent=1 // pred_check_branch
      %12 = sbr.rel (0) target = $region9
    $region8: #{multi_head_attention.7} parent=1 // pred_region
      _
    $region9: #{multi_head_attention.7} parent=1 // pred_fallthru
      _
    // Predicated region
    $region10: #{multi_head_attention.7} parent=1 // pred_check
      _
    $region11: #{multi_head_attention.7} parent=1 // pred_check_branch
      %14 = sbr.rel (0) target = $region13
    $region12: #{multi_head_attention.7} parent=1 // pred_region
      _
    $region13: #{multi_head_attention.7} parent=1 // pred_fallthru
      _
    %p15 = scmp.eq.s32.totalorder 0, 0
    // Predicated region
    $region14: #{multi_head_attention.7} parent=1 // pred_check
      %p16 = pneg %p15
    $region15: #{multi_head_attention.7} parent=1 // pred_check_branch
      %18 = sbr.rel (%p16) target = $region17
    $region16: #{multi_head_attention.7} parent=1 // pred_region
      %vm19 = vcmask 261120
      %20 = vst.msk [vmem:[#allocation2] sm:$0xff] %vm19, 0.0
      %21 = vst.msk [vmem:[#allocation2 + $0x8] sm:$0xff] %vm19, 0.0
    $region17: #{multi_head_attention.7} parent=1 // pred_fallthru
      _
    %v22 = vld [vmem:[#allocation2] sm:$0xff]
    %v23 = vld [vmem:[#allocation2 + $0x8] sm:$0xff]
    %v24 = vld [vmem:[%s0] sm:$0xff]
    %v25 = vld [vmem:[%s0 + $0x8] sm:$0xff]
    %v26 = vld [vmem:[%s1] sm:$0xff]
    %v27 = vld [vmem:[%s1 + $0x8] sm:$0xff]
    %v28 = vld [vmem:[%s1 + $0x10] sm:$0xff]
    %v29 = vld [vmem:[%s1 + $0x18] sm:$0xff]
    %vm30 = vcmask 261120
    %v32 = vsel %vm30, %v24, 0
    %v35 = vsel %vm30, %v25, 0
    %37 = vmatprep.subr.mxu0 0.0
    %38 = vmatpush1.msra.mxu0 %v26
    %39 = vmatprep.subr.mxu0 0.0
    %40 = vmatpush1.msra.mxu0 %v27
    %41 = vmatprep.subr.mxu0 0.0
    %42 = vmatpush1.msra.mxu0 %v28
    %43 = vmatprep.subr.mxu0 0.0
    %44 = vmatpush1.msra.mxu0 %v29
    %45 = vmatprep.subr.mxu0 0.0
    %46 = vmatpush1.msra.mxu0 0.0
    %47 = vmatprep.subr.mxu0 0.0
    %48 = vmatpush1.msra.mxu0 0.0
    %49 = vmatprep.subr.mxu0 0.0
    %50 = vmatpush1.msra.mxu0 0.0
    %51 = vmatprep.subr.mxu0 0.0
    %52 = vmatpush1.msra.mxu0 0.0
    %53 = vmatprep.subr.mxu0 0.0
    %54 = vmatpush1.msra.mxu0 0.0
    %55 = vmatprep.subr.mxu0 0.0
    %56 = vmatpush1.msra.mxu0 0.0
    %57 = vmatprep.subr.mxu0 0.0
    %58 = vmatpush1.msra.mxu0 0.0
    %59 = vmatprep.subr.mxu0 0.0
    %60 = vmatpush1.msra.mxu0 0.0
    %61 = vmatprep.subr.mxu0 0.0
    %62 = vmatpush1.msra.mxu0 0.0
    %63 = vmatprep.subr.mxu0 0.0
    %64 = vmatpush1.msra.mxu0 0.0
    %65 = vmatprep.subr.mxu0 0.0
    %66 = vmatpush1.msra.mxu0 0.0
    %67 = vmatprep.subr.mxu0 0.0
    %68 = vmatpush1.msra.mxu0 0.0
    %69 = vmatprep.subr.mxu0 0.0
    %70 = vmatpush1.msra.mxu0 0.0
    %71 = vmatprep.subr.mxu0 0.0
    %72 = vmatpush1.msra.mxu0 0.0
    %73 = vmatprep.subr.mxu0 0.0
    %74 = vmatpush1.msra.mxu0 0.0
    %75 = vmatprep.subr.mxu0 0.0
    %76 = vmatpush1.msra.mxu0 0.0
    %77 = vmatprep.subr.mxu0 0.0
    %78 = vmatpush1.msra.mxu0 0.0
    %79 = vmatprep.subr.mxu0 0.0
    %80 = vmatpush1.msra.mxu0 0.0
    %81 = vmatprep.subr.mxu0 0.0
    %82 = vmatpush1.msra.mxu0 0.0
    %83 = vmatprep.subr.mxu0 0.0
    %84 = vmatpush1.msra.mxu0 0.0
    %85 = vmatprep.subr.mxu0 0.0
    %86 = vmatpush1.msra.mxu0 0.0
    %87 = vmatprep.subr.mxu0 0.0
    %88 = vmatpush1.msra.mxu0 0.0
    %89 = vmatprep.subr.mxu0 0.0
    %90 = vmatpush1.msra.mxu0 0.0
    %91 = vmatprep.subr.mxu0 0.0
    %92 = vmatpush1.msra.mxu0 0.0
    %93 = vmatprep.subr.mxu0 0.0
    %94 = vmatpush1.msra.mxu0 0.0
    %95 = vmatprep.subr.mxu0 0.0
    %96 = vmatpush1.msra.mxu0 0.0
    %97 = vmatprep.subr.mxu0 0.0
    %98 = vmatpush1.msra.mxu0 0.0
    %99 = vmatprep.subr.mxu0 0.0
    %100 = vmatpush1.msra.mxu0 0.0
    %101 = vmatprep.mubr.f32.mxu0 0.0
    %102 = vmatmul.mubr.f32.gmra.mrb[0].mxu0 %v32
    %v103 = vpop.f32.mrb[0].mxu0
    %v104 = vadd.f32 0.0, %v103
    %v105 = vpop.f32.mrb[0].mxu0
    %106 = vmatprep.mubr.f32.mxu0 0.0
    %107 = vmatmul.mubr.f32.gmra.mrb[0].mxu0 %v35
    %v108 = vpop.f32.mrb[0].mxu0
    %v109 = vadd.f32 0.0, %v108
    %v110 = vpop.f32.mrb[0].mxu0
    %111 = vdwg.mxu0
    %v112 = vadd.f32 %v22, %v104
    %v113 = vadd.f32 %v23, %v109
    %114 = vst.msk [vmem:[#allocation2] sm:$0xff] %vm30, %v112
    %115 = vst.msk [vmem:[#allocation2 + $0x8] sm:$0xff] %vm30, %v113
    // Predicated region
    $region18: #{multi_head_attention.7} parent=1 // pred_check
      %p116 = pneg %p15
    $region19: #{multi_head_attention.7} parent=1 // pred_check_branch
      %118 = sbr.rel (%p116) target = $region21
    $region20: #{multi_head_attention.7} parent=1 // pred_region
      %v119 = vld [vmem:[#allocation2] sm:$0xff]
      %v120 = vld [vmem:[#allocation2 + $0x8] sm:$0xff]
      %v121 = vld [vmem:[%s2] sm:$0x1]
      %v123 = vlaneseq
      %v124 = vshrl.u32 %v123, 7
      %v125 = vsub.s32 0, %v124
      %v126 = vrot.slane %v121, %v125
      %v128 = vadd.f32 %v119, %v126
      %v129 = vadd.f32 %v120, %v126
      %130 = vst.msk [vmem:[#allocation3] sm:$0xff] %vm30, %v128
      %131 = vst.msk [vmem:[#allocation3 + $0x8] sm:$0xff] %vm30, %v129
    $region21: #{multi_head_attention.7} parent=1 // pred_fallthru
      _
    // Predicated region
    $region22: #{multi_head_attention.7} parent=1 // pred_check
      _
    $region23: #{multi_head_attention.7} parent=1 // pred_check_branch
      %133 = sbr.rel (0) target = $region25
    $region24: #{multi_head_attention.7} parent=1 // pred_region
      %s135 = ssub.s32 256, 256
      %136 = vsyncadd [#allocation4], %s135
      %s137 = sshll.u32 [#allocation3], 4
      %s138 = int_to_ptr.vmem [resolvable:$true] %s137
      %143 = dma.vmem_to_hbm [thread:$0]  %s138, 256, %s3, [#allocation4], 128, 128, 8
    $region25: #{multi_head_attention.7} parent=1 // pred_fallthru
      _
    // Predicated region
    $region26: #{multi_head_attention.7} parent=1 // pred_check
      _
    $region27: #{multi_head_attention.7} parent=1 // pred_check_branch
      %145 = sbr.rel (0) target = $region29
    $region28: #{multi_head_attention.7} parent=1 // pred_region
      %146 = dma.done [#allocation4], 256
    $region29: #{multi_head_attention.7} parent=1 // pred_fallthru
      _
    %147 = vsyncpa [#allocation4], 1

// kernel: multi_head_attention.8
$region0: #{multi_head_attention.8}
  #allocation0 [shape = 'u32[]', space=smem, size = 0x4, offset = 0x4, fixed_abs, tag = 'smem constant byte address 0x4 - core index']
  #allocation1 [shape = 'u32[144,128]{1,0:T(1,128)}', space=vmem, size = 0x12000, scoped, tag = 'internal scratch']
  %s0 = inlined_call_operand.hbm [shape: f32[2,8,32], index: 0, kind: input, shape index: {}]
  %s1 = inlined_call_operand.hbm [shape: f32[2,8,32], index: 1, kind: input, shape index: {}]
  %s2 = inlined_call_operand.hbm [shape: f32[2,8,32], index: 2, kind: input, shape index: {}]
  %s3 = inlined_call_operand.hbm [shape: f32[2,8,32], index: 3, kind: output, shape index: {}]
  %s4 = sld [smem:[#allocation0]]
  $region57: #{multi_head_attention.8} parent=0
    _
  %s6 = ssub.s32 1, %s4
  %s7 = scalar_select 0, %s6, %s4
  $region1: #{multi_head_attention.8} parent=0
    #allocation2 [shape = 'u8[8192]{0}', space=vmem, size = 0x2000, scoped, tag = 'input window, operand 0']
    #allocation3 [shape = 's32[2]{0}', space=sflag, size = 0x8, scoped, tag = 'scoped memory for multi_head_attention.8']
    #allocation4 [shape = 's32[2]{0}', space=sflag, size = 0x8, scoped, tag = 'scoped memory for multi_head_attention.8']
    #allocation5 [shape = 'u8[8192]{0}', space=vmem, size = 0x2000, scoped, tag = 'input window, operand 1']
    #allocation6 [shape = 's32[2]{0}', space=sflag, size = 0x8, scoped, tag = 'scoped memory for multi_head_attention.8']
    #allocation7 [shape = 'u8[8192]{0}', space=vmem, size = 0x2000, scoped, tag = 'input window, operand 2']
    #allocation8 [shape = 'u8[8192]{0}', space=vmem, size = 0x2000, scoped, tag = 'output window, operand 0']
    %8 = vsyncpa [#allocation3], 0
    %s9 = scalar_lea.sflag [#allocation3], 1
    %10 = vsyncpa %s9, 0
    %11 = vsyncpa [#allocation6], 0
    %s12 = scalar_lea.sflag [#allocation6], 1
    %13 = vsyncpa %s12, 0
    %14 = vsyncpa [#allocation4], 0
    %s15 = scalar_lea.sflag [#allocation4], 1
    %16 = vsyncpa %s15, 0
    loop: start=0, step=1, limit=4
    $region2: #{multi_head_attention.8} parent=1 // loop_pre_header
      _
    $region3: #{multi_head_attention.8} parent=1 // loop_header
      %s18 = sphi 0, %s22
      %p19 = scmp.ge.s32.totalorder %s18, 4
      %s25 = sphi 0, %s37
      %s26 = sphi 0, %s33
      %s27 = sphi 0, %s25
      %s28 = sphi 0, %s26
      %s29 = sphi 0, %s27
      %s30 = sphi 0, %s28
      %s42 = sphi 0, %s44
      %s45 = sphi 0, %s42
      %s46 = sphi 0, %s45
      %s62 = sphi 0, %s46
      %s68 = sphi 0, %s70
      %s71 = sphi 0, %s68
      %s72 = sphi 0, %s71
      %s88 = sphi 0, %s72
      %s94 = sphi 0, %s96
      %s97 = sphi 0, %s94
      %s98 = sphi 0, %s97
      %s114 = sphi 0, %s98
      %s122 = sphi 0, %s124
      %s125 = sphi 0, %s122
      %s126 = sphi 0, %s125
      %s142 = sphi 0, %s126
    $region4: #{multi_head_attention.8} parent=1 // loop_header_branch
      %21 = sbr.rel (%p19) target = $region8
    $region5: #{multi_head_attention.8} parent=1 // loop_body
      %s23 = ssub.s32 %s18, 1
      %s24 = ssub.s32 %s18, 2
      %s31 = sadd.s32 1, %s26
      %p32 = scmp.ge.s32.totalorder %s31, 1
      %s33 = scalar_select %p32, 0, %s31
      %s34 = sadd.s32 1, %s25
      %s35 = scalar_select %p32, %s34, %s25
      %p36 = scmp.ge.s32.totalorder %s35, 2
      %s37 = scalar_select %p36, 0, %s35
      %s38 = ssub.s32 %s25, %s37
      %s39 = ssub.s32 %s26, %s33
      %s40 = sor.u32 %s38, %s39
      %p41 = scmp.eq.s32.totalorder %s40, 0
      %s43 = sadd.s32 %s42, 1
      %s44 = scalar_select %p41, %s42, %s43
      %p47 = pneg %p41
      %p48 = scmp.eq.s32.totalorder %s18, 1
      %p49 = por %p47, %p48
      %p50 = scmp.ne.s32.totalorder %s42, %s45
      %p51 = scmp.eq.s32.totalorder %s18, 0
      %p52 = por %p50, %p51
      %p53 = scmp.ne.s32.totalorder %s42, %s45
      %p54 = scmp.eq.s32.totalorder %s23, 1
      %p55 = por %p53, %p54
      %p56 = scmp.ne.s32.totalorder %s45, %s46
      %p57 = scmp.eq.s32.totalorder %s23, 0
      %p58 = por %p56, %p57
      %p59 = scmp.ne.s32.totalorder %s45, %s46
      %p60 = scmp.eq.s32.totalorder %s24, 1
      %p61 = por %p59, %p60
      %p63 = scmp.ne.s32.totalorder %s46, %s62
      %p64 = scmp.eq.s32.totalorder %s24, 0
      %p65 = por %p63, %p64
      %s66 = ssub.s32 %s25, %s37
      %p67 = scmp.eq.s32.totalorder %s66, 0
      %s69 = sadd.s32 %s68, 1
      %s70 = scalar_select %p67, %s68, %s69
      %p73 = pneg %p67
      %p74 = scmp.eq.s32.totalorder %s18, 1
      %p75 = por %p73, %p74
      %p76 = scmp.ne.s32.totalorder %s68, %s71
      %p77 = scmp.eq.s32.totalorder %s18, 0
      %p78 = por %p76, %p77
      %p79 = scmp.ne.s32.totalorder %s68, %s71
      %p80 = scmp.eq.s32.totalorder %s23, 1
      %p81 = por %p79, %p80
      %p82 = scmp.ne.s32.totalorder %s71, %s72
      %p83 = scmp.eq.s32.totalorder %s23, 0
      %p84 = por %p82, %p83
      %p85 = scmp.ne.s32.totalorder %s71, %s72
      %p86 = scmp.eq.s32.totalorder %s24, 1
      %p87 = por %p85, %p86
      %p89 = scmp.ne.s32.totalorder %s72, %s88
      %p90 = scmp.eq.s32.totalorder %s24, 0
      %p91 = por %p89, %p90
      %s92 = ssub.s32 %s25, %s37
      %p93 = scmp.eq.s32.totalorder %s92, 0
      %s95 = sadd.s32 %s94, 1
      %s96 = scalar_select %p93, %s94, %s95
      %p99 = pneg %p93
      %p100 = scmp.eq.s32.totalorder %s18, 1
      %p101 = por %p99, %p100
      %p102 = scmp.ne.s32.totalorder %s94, %s97
      %p103 = scmp.eq.s32.totalorder %s18, 0
      %p104 = por %p102, %p103
      %p105 = scmp.ne.s32.totalorder %s94, %s97
      %p106 = scmp.eq.s32.totalorder %s23, 1
      %p107 = por %p105, %p106
      %p108 = scmp.ne.s32.totalorder %s97, %s98
      %p109 = scmp.eq.s32.totalorder %s23, 0
      %p110 = por %p108, %p109
      %p111 = scmp.ne.s32.totalorder %s97, %s98
      %p112 = scmp.eq.s32.totalorder %s24, 1
      %p113 = por %p111, %p112
      %p115 = scmp.ne.s32.totalorder %s98, %s114
      %p116 = scmp.eq.s32.totalorder %s24, 0
      %p117 = por %p115, %p116
      %s118 = ssub.s32 %s25, %s37
      %s119 = ssub.s32 %s26, %s33
      %s120 = sor.u32 %s118, %s119
      %p121 = scmp.eq.s32.totalorder %s120, 0
      %s123 = sadd.s32 %s122, 1
      %s124 = scalar_select %p121, %s122, %s123
      %p127 = pneg %p121
      %p128 = scmp.eq.s32.totalorder %s18, 1
      %p129 = por %p127, %p128
      %p130 = scmp.ne.s32.totalorder %s122, %s125
      %p131 = scmp.eq.s32.totalorder %s18, 0
      %p132 = por %p130, %p131
      %p133 = scmp.ne.s32.totalorder %s122, %s125
      %p134 = scmp.eq.s32.totalorder %s23, 1
      %p135 = por %p133, %p134
      %p136 = scmp.ne.s32.totalorder %s125, %s126
      %p137 = scmp.eq.s32.totalorder %s23, 0
      %p138 = por %p136, %p137
      %p139 = scmp.ne.s32.totalorder %s125, %s126
      %p140 = scmp.eq.s32.totalorder %s24, 1
      %p141 = por %p139, %p140
      %p143 = scmp.ne.s32.totalorder %s126, %s142
      %p144 = scmp.eq.s32.totalorder %s24, 0
      %p145 = por %p143, %p144
      %p146 = scmp.le.s32.totalorder 1, %s18
      %p147 = scmp.lt.s32.totalorder %s18, 3
      %p148 = pnand %p146, %p147
      %p149 = pneg %p148
      // Predicated region
      $region9: #{multi_head_attention.8} parent=5 // pred_check
        _
      $region10: #{multi_head_attention.8} parent=5 // pred_check_branch
        %151 = sbr.rel (%p148) target = $region12
      $region11: #{multi_head_attention.8} parent=5 // pred_region
        %s152 = ssub.s32 %s18, 1
      $region12: #{multi_head_attention.8} parent=5 // pred_fallthru
        _
      %p153 = scmp.lt.s32.totalorder %s18, 2
      // Predicated region
      $region13: #{multi_head_attention.8} parent=5 // pred_check
        %p154 = pneg %p153
      $region14: #{multi_head_attention.8} parent=5 // pred_check_branch
        %156 = sbr.rel (%p154) target = $region16
      $region15: #{multi_head_attention.8} parent=5 // pred_region
        // Predicated region
        $region17: #{multi_head_attention.8} parent=15 // pred_check
          %p157 = pneg %p52
        $region18: #{multi_head_attention.8} parent=15 // pred_check_branch
          %159 = sbr.rel (%p157) target = $region20
        $region19: #{multi_head_attention.8} parent=15 // pred_region
          %s160 = sand.u32 %s42, 1
          %s161 = scalar_lea.sflag [#allocation3], %s160
          %s162 = sand.u32 %s42, 1
          %s163 = smul.addr %s162, 8
          %s164 = scalar_lea.vmem [#allocation2], %s163
          %s166 = ssub.s32 128, 128
          %167 = vsyncadd %s161, %s166
          %s168 = sadd.s32 %s26, %s25
          %s169 = smul.addr %s168, 128
          %s170 = scalar_lea.hbm %s0, %s169
          %s172 = sshll.u32 %s164, 4
          %s173 = int_to_ptr.vmem [resolvable:$true] %s172
          %175 = dma.hbm_to_vmem [thread:$0]  %s170, 128, %s173, %s161
        $region20: #{multi_head_attention.8} parent=15 // pred_fallthru
          _
        // Predicated region
        $region21: #{multi_head_attention.8} parent=15 // pred_check
          %p176 = pneg %p78
        $region22: #{multi_head_attention.8} parent=15 // pred_check_branch
          %178 = sbr.rel (%p176) target = $region24
        $region23: #{multi_head_attention.8} parent=15 // pred_region
          %s179 = sand.u32 %s18, 1
          %s180 = scalar_lea.sflag [#allocation6], %s179
          %s181 = sand.u32 %s68, 1
          %s182 = smul.addr %s181, 8
          %s183 = scalar_lea.vmem [#allocation5], %s182
          %s185 = ssub.s32 128, 128
          %186 = vsyncadd %s180, %s185
          %s187 = smul.addr %s25, 128
          %s188 = scalar_lea.hbm %s1, %s187
          %s190 = sshll.u32 %s183, 4
          %s191 = int_to_ptr.vmem [resolvable:$true] %s190
          %193 = dma.hbm_to_vmem [thread:$0]  %s188, 128, %s191, %s180
        $region24: #{multi_head_attention.8} parent=15 // pred_fallthru
          _
        // Predicated region
        $region25: #{multi_head_attention.8} parent=15 // pred_check
          %p194 = pneg %p104
        $region26: #{multi_head_attention.8} parent=15 // pred_check_branch
          %196 = sbr.rel (%p194) target = $region28
        $region27: #{multi_head_attention.8} parent=15 // pred_region
          %s197 = sand.u32 %s18, 1
          %s198 = scalar_lea.sflag [#allocation6], %s197
          %s199 = sand.u32 %s94, 1
          %s200 = smul.addr %s199, 8
          %s201 = scalar_lea.vmem [#allocation7], %s200
          %s203 = ssub.s32 128, 128
          %204 = vsyncadd %s198, %s203
          %s205 = smul.addr %s25, 128
          %s206 = scalar_lea.hbm %s2, %s205
          %s208 = sshll.u32 %s201, 4
          %s209 = int_to_ptr.vmem [resolvable:$true] %s208
          %211 = dma.hbm_to_vmem [thread:$0]  %s206, 128, %s209, %s198
        $region28: #{multi_head_attention.8} parent=15 // pred_fallthru
          _
      $region16: #{multi_head_attention.8} parent=5 // pred_fallthru
        _
      %p212 = scmp.le.s32.totalorder 1, %s18
      %p213 = scmp.lt.s32.totalorder %s18, 3
      %p214 = pnand %p212, %p213
      %p215 = pneg %p214
      // Predicated region
      $region29: #{multi_head_attention.8} parent=5 // pred_check
        _
      $region30: #{multi_head_attention.8} parent=5 // pred_check_branch
        %217 = sbr.rel (%p214) target = $region32
      $region31: #{multi_head_attention.8} parent=5 // pred_region
        %s218 = ssub.s32 %s18, 1
        %s219 = sand.u32 %s45, 1
        %s220 = scalar_lea.sflag [#allocation3], %s219
        %s221 = sand.u32 %s45, 1
        %s222 = smul.addr %s221, 8
        %s223 = scalar_lea.vmem [#allocation2], %s222
        // Predicated region
        $region33: #{multi_head_attention.8} parent=31 // pred_check
          %p224 = pneg %p58
        $region34: #{multi_head_attention.8} parent=31 // pred_check_branch
          %226 = sbr.rel (%p224) target = $region36
        $region35: #{multi_head_attention.8} parent=31 // pred_region
          %227 = dma.done %s220, 128
        $region36: #{multi_head_attention.8} parent=31 // pred_fallthru
          _
        %s228 = sand.u32 %s23, 1
        %s229 = scalar_lea.sflag [#allocation6], %s228
        %s230 = sand.u32 %s71, 1
        %s231 = smul.addr %s230, 8
        %s232 = scalar_lea.vmem [#allocation5], %s231
        // Predicated region
        $region37: #{multi_head_attention.8} parent=31 // pred_check
          %p233 = pneg %p84
        $region38: #{multi_head_attention.8} parent=31 // pred_check_branch
          %235 = sbr.rel (%p233) target = $region40
        $region39: #{multi_head_attention.8} parent=31 // pred_region
          %236 = dma.done %s229, 128
        $region40: #{multi_head_attention.8} parent=31 // pred_fallthru
          _
        %s237 = sand.u32 %s23, 1
        %s238 = scalar_lea.sflag [#allocation6], %s237
        %s239 = sand.u32 %s97, 1
        %s240 = smul.addr %s239, 8
        %s241 = scalar_lea.vmem [#allocation7], %s240
        // Predicated region
        $region41: #{multi_head_attention.8} parent=31 // pred_check
          %p242 = pneg %p110
        $region42: #{multi_head_attention.8} parent=31 // pred_check_branch
          %244 = sbr.rel (%p242) target = $region44
        $region43: #{multi_head_attention.8} parent=31 // pred_region
          %245 = dma.done %s238, 128
        $region44: #{multi_head_attention.8} parent=31 // pred_fallthru
          _
        %s246 = sand.u32 %s45, 1
        %s247 = scalar_lea.sflag [#allocation3], %s246
        %s248 = sand.u32 %s45, 1
        %s249 = smul.addr %s248, 8
        %s250 = scalar_lea.vmem [#allocation2], %s249
        %p251 = pneg %p58
        %p252 = pneg %p55
        %s253 = sand.u32 %s23, 1
        %s254 = scalar_lea.sflag [#allocation6], %s253
        %s255 = sand.u32 %s71, 1
        %s256 = smul.addr %s255, 8
        %s257 = scalar_lea.vmem [#allocation5], %s256
        %p258 = pneg %p84
        %p259 = pneg %p81
        %s260 = sand.u32 %s23, 1
        %s261 = scalar_lea.sflag [#allocation6], %s260
        %s262 = sand.u32 %s97, 1
        %s263 = smul.addr %s262, 8
        %s264 = scalar_lea.vmem [#allocation7], %s263
        %p265 = pneg %p110
        %p266 = pneg %p107
        %p267 = pneg %p138
        %p268 = pneg %p135
        %s269 = sand.u32 %s125, 1
        %s270 = scalar_lea.sflag [#allocation4], %s269
        %s271 = sand.u32 %s125, 1
        %s272 = smul.addr %s271, 8
        %s273 = scalar_lea.vmem [#allocation8], %s272
        %v274 = vld [vmem:[%s223] sm:$0xff]
        %v275 = vld [vmem:[%s232] sm:$0xff]
        %v276 = vld [vmem:[%s241] sm:$0xff]
        %v277 = vmul.f32 %v274, 0.35355338
        %vm278 = vcmask 64512
        %v280 = vsel %vm278, %v277, 0
        %v283 = vsel %vm278, %v275, 0
        %285 = vmatprep.subr.mxu0 0.0
        %286 = vmatpush1.xpose.msra.mxu0 %v283
        %287 = vmatprep.subr.mxu0 0.0
        %288 = vmatpush1.xpose.msra.mxu0 0.0
        %289 = vmatprep.subr.mxu0 0.0
        %290 = vmatpush1.xpose.msra.mxu0 0.0
        %291 = vmatprep.subr.mxu0 0.0
        %292 = vmatpush1.xpose.msra.mxu0 0.0
        %293 = vmatprep.subr.mxu0 0.0
        %294 = vmatpush1.xpose.msra.mxu0 0.0
        %295 = vmatprep.subr.mxu0 0.0
        %296 = vmatpush1.xpose.msra.mxu0 0.0
        %297 = vmatprep.subr.mxu0 0.0
        %298 = vmatpush1.xpose.msra.mxu0 0.0
        %299 = vmatprep.subr.mxu0 0.0
        %300 = vmatpush1.xpose.msra.mxu0 0.0
        %301 = vmatprep.subr.mxu0 0.0
        %302 = vmatpush1.xpose.msra.mxu0 0.0
        %303 = vmatprep.subr.mxu0 0.0
        %304 = vmatpush1.xpose.msra.mxu0 0.0
        %305 = vmatprep.subr.mxu0 0.0
        %306 = vmatpush1.xpose.msra.mxu0 0.0
        %307 = vmatprep.subr.mxu0 0.0
        %308 = vmatpush1.xpose.msra.mxu0 0.0
        %309 = vmatprep.subr.mxu0 0.0
        %310 = vmatpush1.xpose.msra.mxu0 0.0
        %311 = vmatprep.subr.mxu0 0.0
        %312 = vmatpush1.xpose.msra.mxu0 0.0
        %313 = vmatprep.subr.mxu0 0.0
        %314 = vmatpush1.xpose.msra.mxu0 0.0
        %315 = vmatprep.subr.mxu0 0.0
        %316 = vmatpush1.xpose.msra.mxu0 0.0
        %317 = vmatprep.subr.mxu0 0.0
        %318 = vmatpush1.xpose.msra.mxu0 0.0
        %319 = vmatprep.subr.mxu0 0.0
        %320 = vmatpush1.xpose.msra.mxu0 0.0
        %321 = vmatprep.subr.mxu0 0.0
        %322 = vmatpush1.xpose.msra.mxu0 0.0
        %323 = vmatprep.subr.mxu0 0.0
        %324 = vmatpush1.xpose.msra.mxu0 0.0
        %325 = vmatprep.subr.mxu0 0.0
        %326 = vmatpush1.xpose.msra.mxu0 0.0
        %327 = vmatprep.subr.mxu0 0.0
        %328 = vmatpush1.xpose.msra.mxu0 0.0
        %329 = vmatprep.subr.mxu0 0.0
        %330 = vmatpush1.xpose.msra.mxu0 0.0
        %331 = vmatprep.subr.mxu0 0.0
        %332 = vmatpush1.xpose.msra.mxu0 0.0
        %333 = vmatprep.subr.mxu0 0.0
        %334 = vmatpush1.xpose.msra.mxu0 0.0
        %335 = vmatprep.subr.mxu0 0.0
        %336 = vmatpush1.xpose.msra.mxu0 0.0
        %337 = vmatprep.subr.mxu0 0.0
        %338 = vmatpush1.xpose.msra.mxu0 0.0
        %339 = vmatprep.subr.mxu0 0.0
        %340 = vmatpush1.xpose.msra.mxu0 0.0
        %341 = vmatprep.subr.mxu0 0.0
        %342 = vmatpush1.xpose.msra.mxu0 0.0
        %343 = vmatprep.subr.mxu0 0.0
        %344 = vmatpush1.xpose.msra.mxu0 0.0
        %345 = vmatprep.subr.mxu0 0.0
        %346 = vmatpush1.xpose.msra.mxu0 0.0
        %347 = vmatprep.subr.mxu0 0.0
        %348 = vmatpush1.xpose.msra.mxu0 0.0
        %349 = vmatprep.mubr.f32.mxu0 0.0
        %350 = vmatmul.mubr.f32.gmra.mrb[0].mxu0 %v280
        %v351 = vpop.f32.mrb[0].mxu0
        %v352 = vadd.f32 0.0, %v351
        %v353 = vpop.f32.mrb[0].mxu0
        %354 = vdwg.mxu0
        %v355 = vsel %vm278, %v352, -inf
        %356 = vmax.xlane.f32.xlu0 %v355
        %v357 = vpop.xlane.xlu0 %356
        %v358 = vsub.f32 %v352, %v357
        %v359 = vmul.f32 %v358, 1.442695
        %v360 = vpow.pop %v359
        %v361 = vsel %vm278, %v360, 0.0
        %362 = vadd.xlane.f32.xlu0 %v361
        %v363 = vpop.xlane.xlu0 %362
        %v365 = vsel %vm278, %v360, 0
        %367 = vmatprep.subr.mxu0 0.0
        %368 = vmatpush1.msra.mxu0 %v276
        %369 = vmatprep.subr.mxu0 0.0
        %370 = vmatpush1.msra.mxu0 0.0
        %371 = vmatprep.subr.mxu0 0.0
        %372 = vmatpush1.msra.mxu0 0.0
        %373 = vmatprep.subr.mxu0 0.0
        %374 = vmatpush1.msra.mxu0 0.0
        %375 = vmatprep.subr.mxu0 0.0
        %376 = vmatpush1.msra.mxu0 0.0
        %377 = vmatprep.subr.mxu0 0.0
        %378 = vmatpush1.msra.mxu0 0.0
        %379 = vmatprep.subr.mxu0 0.0
        %380 = vmatpush1.msra.mxu0 0.0
        %381 = vmatprep.subr.mxu0 0.0
        %382 = vmatpush1.msra.mxu0 0.0
        %383 = vmatprep.subr.mxu0 0.0
        %384 = vmatpush1.msra.mxu0 0.0
        %385 = vmatprep.subr.mxu0 0.0
        %386 = vmatpush1.msra.mxu0 0.0
        %387 = vmatprep.subr.mxu0 0.0
        %388 = vmatpush1.msra.mxu0 0.0
        %389 = vmatprep.subr.mxu0 0.0
        %390 = vmatpush1.msra.mxu0 0.0
        %391 = vmatprep.subr.mxu0 0.0
        %392 = vmatpush1.msra.mxu0 0.0
        %393 = vmatprep.subr.mxu0 0.0
        %394 = vmatpush1.msra.mxu0 0.0
        %395 = vmatprep.subr.mxu0 0.0
        %396 = vmatpush1.msra.mxu0 0.0
        %397 = vmatprep.subr.mxu0 0.0
        %398 = vmatpush1.msra.mxu0 0.0
        %399 = vmatprep.subr.mxu0 0.0
        %400 = vmatpush1.msra.mxu0 0.0
        %401 = vmatprep.subr.mxu0 0.0
        %402 = vmatpush1.msra.mxu0 0.0
        %403 = vmatprep.subr.mxu0 0.0
        %404 = vmatpush1.msra.mxu0 0.0
        %405 = vmatprep.subr.mxu0 0.0
        %406 = vmatpush1.msra.mxu0 0.0
        %407 = vmatprep.subr.mxu0 0.0
        %408 = vmatpush1.msra.mxu0 0.0
        %409 = vmatprep.subr.mxu0 0.0
        %410 = vmatpush1.msra.mxu0 0.0
        %411 = vmatprep.subr.mxu0 0.0
        %412 = vmatpush1.msra.mxu0 0.0
        %413 = vmatprep.subr.mxu0 0.0
        %414 = vmatpush1.msra.mxu0 0.0
        %415 = vmatprep.subr.mxu0 0.0
        %416 = vmatpush1.msra.mxu0 0.0
        %417 = vmatprep.subr.mxu0 0.0
        %418 = vmatpush1.msra.mxu0 0.0
        %419 = vmatprep.subr.mxu0 0.0
        %420 = vmatpush1.msra.mxu0 0.0
        %421 = vmatprep.subr.mxu0 0.0
        %422 = vmatpush1.msra.mxu0 0.0
        %423 = vmatprep.subr.mxu0 0.0
        %424 = vmatpush1.msra.mxu0 0.0
        %425 = vmatprep.subr.mxu0 0.0
        %426 = vmatpush1.msra.mxu0 0.0
        %427 = vmatprep.subr.mxu0 0.0
        %428 = vmatpush1.msra.mxu0 0.0
        %429 = vmatprep.subr.mxu0 0.0
        %430 = vmatpush1.msra.mxu0 0.0
        %431 = vmatprep.mubr.f32.mxu0 0.0
        %432 = vmatmul.mubr.f32.gmra.mrb[0].mxu0 %v365
        %v433 = vpop.f32.mrb[0].mxu0
        %v434 = vadd.f32 0.0, %v433
        %v435 = vpop.f32.mrb[0].mxu0
        %436 = vdwg.mxu0
        %v437 = vrcp.pop %v363
        %v438 = vmul.f32 %v434, %v437
        %439 = vrot.lane.b32.xlu0 %v277, 120
        %v440 = vpop.permute.xlu0 %439
        %441 = vrot.lane.b32.xlu0 %v275, 120
        %v442 = vpop.permute.xlu0 %441
        %v443 = vsel %vm278, %v440, 0
        %v445 = vsel %vm278, %v442, 0
        %447 = vmatprep.subr.mxu0 0.0
        %448 = vmatpush1.xpose.msra.mxu0 %v445
        %449 = vmatprep.subr.mxu0 0.0
        %450 = vmatpush1.xpose.msra.mxu0 0.0
        %451 = vmatprep.subr.mxu0 0.0
        %452 = vmatpush1.xpose.msra.mxu0 0.0
        %453 = vmatprep.subr.mxu0 0.0
        %454 = vmatpush1.xpose.msra.mxu0 0.0
        %455 = vmatprep.subr.mxu0 0.0
        %456 = vmatpush1.xpose.msra.mxu0 0.0
        %457 = vmatprep.subr.mxu0 0.0
        %458 = vmatpush1.xpose.msra.mxu0 0.0
        %459 = vmatprep.subr.mxu0 0.0
        %460 = vmatpush1.xpose.msra.mxu0 0.0
        %461 = vmatprep.subr.mxu0 0.0
        %462 = vmatpush1.xpose.msra.mxu0 0.0
        %463 = vmatprep.subr.mxu0 0.0
        %464 = vmatpush1.xpose.msra.mxu0 0.0
        %465 = vmatprep.subr.mxu0 0.0
        %466 = vmatpush1.xpose.msra.mxu0 0.0
        %467 = vmatprep.subr.mxu0 0.0
        %468 = vmatpush1.xpose.msra.mxu0 0.0
        %469 = vmatprep.subr.mxu0 0.0
        %470 = vmatpush1.xpose.msra.mxu0 0.0
        %471 = vmatprep.subr.mxu0 0.0
        %472 = vmatpush1.xpose.msra.mxu0 0.0
        %473 = vmatprep.subr.mxu0 0.0
        %474 = vmatpush1.xpose.msra.mxu0 0.0
        %475 = vmatprep.subr.mxu0 0.0
        %476 = vmatpush1.xpose.msra.mxu0 0.0
        %477 = vmatprep.subr.mxu0 0.0
        %478 = vmatpush1.xpose.msra.mxu0 0.0
        %479 = vmatprep.subr.mxu0 0.0
        %480 = vmatpush1.xpose.msra.mxu0 0.0
        %481 = vmatprep.subr.mxu0 0.0
        %482 = vmatpush1.xpose.msra.mxu0 0.0
        %483 = vmatprep.subr.mxu0 0.0
        %484 = vmatpush1.xpose.msra.mxu0 0.0
        %485 = vmatprep.subr.mxu0 0.0
        %486 = vmatpush1.xpose.msra.mxu0 0.0
        %487 = vmatprep.subr.mxu0 0.0
        %488 = vmatpush1.xpose.msra.mxu0 0.0
        %489 = vmatprep.subr.mxu0 0.0
        %490 = vmatpush1.xpose.msra.mxu0 0.0
        %491 = vmatprep.subr.mxu0 0.0
        %492 = vmatpush1.xpose.msra.mxu0 0.0
        %493 = vmatprep.subr.mxu0 0.0
        %494 = vmatpush1.xpose.msra.mxu0 0.0
        %495 = vmatprep.subr.mxu0 0.0
        %496 = vmatpush1.xpose.msra.mxu0 0.0
        %497 = vmatprep.subr.mxu0 0.0
        %498 = vmatpush1.xpose.msra.mxu0 0.0
        %499 = vmatprep.subr.mxu0 0.0
        %500 = vmatpush1.xpose.msra.mxu0 0.0
        %501 = vmatprep.subr.mxu0 0.0
        %502 = vmatpush1.xpose.msra.mxu0 0.0
        %503 = vmatprep.subr.mxu0 0.0
        %504 = vmatpush1.xpose.msra.mxu0 0.0
        %505 = vmatprep.subr.mxu0 0.0
        %506 = vmatpush1.xpose.msra.mxu0 0.0
        %507 = vmatprep.subr.mxu0 0.0
        %508 = vmatpush1.xpose.msra.mxu0 0.0
        %509 = vmatprep.subr.mxu0 0.0
        %510 = vmatpush1.xpose.msra.mxu0 0.0
        %511 = vmatprep.mubr.f32.mxu0 0.0
        %512 = vmatmul.mubr.f32.gmra.mrb[0].mxu0 %v443
        %v513 = vpop.f32.mrb[0].mxu0
        %v514 = vadd.f32 0.0, %v513
        %v515 = vpop.f32.mrb[0].mxu0
        %516 = vdwg.mxu0
        %v517 = vsel %vm278, %v514, -inf
        %518 = vmax.xlane.f32.xlu0 %v517
        %v519 = vpop.xlane.xlu0 %518
        %v520 = vsub.f32 %v514, %v519
        %v521 = vmul.f32 %v520, 1.442695
        %v522 = vpow.pop %v521
        %v523 = vsel %vm278, %v522, 0.0
        %524 = vadd.xlane.f32.xlu0 %v523
        %v525 = vpop.xlane.xlu0 %524
        %527 = vrot.lane.b32.xlu0 %v276, 120
        %v528 = vpop.permute.xlu0 %527
        %v531 = vsel %vm278, %v522, 0
        %533 = vmatprep.subr.mxu0 0.0
        %534 = vmatpush1.msra.mxu0 %v528
        %535 = vmatprep.subr.mxu0 0.0
        %536 = vmatpush1.msra.mxu0 0.0
        %537 = vmatprep.subr.mxu0 0.0
        %538 = vmatpush1.msra.mxu0 0.0
        %539 = vmatprep.subr.mxu0 0.0
        %540 = vmatpush1.msra.mxu0 0.0
        %541 = vmatprep.subr.mxu0 0.0
        %542 = vmatpush1.msra.mxu0 0.0
        %543 = vmatprep.subr.mxu0 0.0
        %544 = vmatpush1.msra.mxu0 0.0
        %545 = vmatprep.subr.mxu0 0.0
        %546 = vmatpush1.msra.mxu0 0.0
        %547 = vmatprep.subr.mxu0 0.0
        %548 = vmatpush1.msra.mxu0 0.0
        %549 = vmatprep.subr.mxu0 0.0
        %550 = vmatpush1.msra.mxu0 0.0
        %551 = vmatprep.subr.mxu0 0.0
        %552 = vmatpush1.msra.mxu0 0.0
        %553 = vmatprep.subr.mxu0 0.0
        %554 = vmatpush1.msra.mxu0 0.0
        %555 = vmatprep.subr.mxu0 0.0
        %556 = vmatpush1.msra.mxu0 0.0
        %557 = vmatprep.subr.mxu0 0.0
        %558 = vmatpush1.msra.mxu0 0.0
        %559 = vmatprep.subr.mxu0 0.0
        %560 = vmatpush1.msra.mxu0 0.0
        %561 = vmatprep.subr.mxu0 0.0
        %562 = vmatpush1.msra.mxu0 0.0
        %563 = vmatprep.subr.mxu0 0.0
        %564 = vmatpush1.msra.mxu0 0.0
        %565 = vmatprep.subr.mxu0 0.0
        %566 = vmatpush1.msra.mxu0 0.0
        %567 = vmatprep.subr.mxu0 0.0
        %568 = vmatpush1.msra.mxu0 0.0
        %569 = vmatprep.subr.mxu0 0.0
        %570 = vmatpush1.msra.mxu0 0.0
        %571 = vmatprep.subr.mxu0 0.0
        %572 = vmatpush1.msra.mxu0 0.0
        %573 = vmatprep.subr.mxu0 0.0
        %574 = vmatpush1.msra.mxu0 0.0
        %575 = vmatprep.subr.mxu0 0.0
        %576 = vmatpush1.msra.mxu0 0.0
        %577 = vmatprep.subr.mxu0 0.0
        %578 = vmatpush1.msra.mxu0 0.0
        %579 = vmatprep.subr.mxu0 0.0
        %580 = vmatpush1.msra.mxu0 0.0
        %581 = vmatprep.subr.mxu0 0.0
        %582 = vmatpush1.msra.mxu0 0.0
        %583 = vmatprep.subr.mxu0 0.0
        %584 = vmatpush1.msra.mxu0 0.0
        %585 = vmatprep.subr.mxu0 0.0
        %586 = vmatpush1.msra.mxu0 0.0
        %587 = vmatprep.subr.mxu0 0.0
        %588 = vmatpush1.msra.mxu0 0.0
        %589 = vmatprep.subr.mxu0 0.0
        %590 = vmatpush1.msra.mxu0 0.0
        %591 = vmatprep.subr.mxu0 0.0
        %592 = vmatpush1.msra.mxu0 0.0
        %593 = vmatprep.subr.mxu0 0.0
        %594 = vmatpush1.msra.mxu0 0.0
        %595 = vmatprep.subr.mxu0 0.0
        %596 = vmatpush1.msra.mxu0 0.0
        %597 = vmatprep.mubr.f32.mxu0 0.0
        %598 = vmatmul.mubr.f32.gmra.mrb[0].mxu0 %v531
        %v599 = vpop.f32.mrb[0].mxu0
        %v600 = vadd.f32 0.0, %v599
        %v601 = vpop.f32.mrb[0].mxu0
        %602 = vdwg.mxu0
        %v603 = vrcp.pop %v525
        %v604 = vmul.f32 %v600, %v603
        %605 = vrot.lane.b32.xlu0 %v277, 112
        %v606 = vpop.permute.xlu0 %605
        %607 = vrot.lane.b32.xlu0 %v275, 112
        %v608 = vpop.permute.xlu0 %607
        %v609 = vsel %vm278, %v606, 0
        %v611 = vsel %vm278, %v608, 0
        %613 = vmatprep.subr.mxu0 0.0
        %614 = vmatpush1.xpose.msra.mxu0 %v611
        %615 = vmatprep.subr.mxu0 0.0
        %616 = vmatpush1.xpose.msra.mxu0 0.0
        %617 = vmatprep.subr.mxu0 0.0
        %618 = vmatpush1.xpose.msra.mxu0 0.0
        %619 = vmatprep.subr.mxu0 0.0
        %620 = vmatpush1.xpose.msra.mxu0 0.0
        %621 = vmatprep.subr.mxu0 0.0
        %622 = vmatpush1.xpose.msra.mxu0 0.0
        %623 = vmatprep.subr.mxu0 0.0
        %624 = vmatpush1.xpose.msra.mxu0 0.0
        %625 = vmatprep.subr.mxu0 0.0
        %626 = vmatpush1.xpose.msra.mxu0 0.0
        %627 = vmatprep.subr.mxu0 0.0
        %628 = vmatpush1.xpose.msra.mxu0 0.0
        %629 = vmatprep.subr.mxu0 0.0
        %630 = vmatpush1.xpose.msra.mxu0 0.0
        %631 = vmatprep.subr.mxu0 0.0
        %632 = vmatpush1.xpose.msra.mxu0 0.0
        %633 = vmatprep.subr.mxu0 0.0
        %634 = vmatpush1.xpose.msra.mxu0 0.0
        %635 = vmatprep.subr.mxu0 0.0
        %636 = vmatpush1.xpose.msra.mxu0 0.0
        %637 = vmatprep.subr.mxu0 0.0
        %638 = vmatpush1.xpose.msra.mxu0 0.0
        %639 = vmatprep.subr.mxu0 0.0
        %640 = vmatpush1.xpose.msra.mxu0 0.0
        %641 = vmatprep.subr.mxu0 0.0
        %642 = vmatpush1.xpose.msra.mxu0 0.0
        %643 = vmatprep.subr.mxu0 0.0
        %644 = vmatpush1.xpose.msra.mxu0 0.0
        %645 = vmatprep.subr.mxu0 0.0
        %646 = vmatpush1.xpose.msra.mxu0 0.0
        %647 = vmatprep.subr.mxu0 0.0
        %648 = vmatpush1.xpose.msra.mxu0 0.0
        %649 = vmatprep.subr.mxu0 0.0
        %650 = vmatpush1.xpose.msra.mxu0 0.0
        %651 = vmatprep.subr.mxu0 0.0
        %652 = vmatpush1.xpose.msra.mxu0 0.0
        %653 = vmatprep.subr.mxu0 0.0
        %654 = vmatpush1.xpose.msra.mxu0 0.0
        %655 = vmatprep.subr.mxu0 0.0
        %656 = vmatpush1.xpose.msra.mxu0 0.0
        %657 = vmatprep.subr.mxu0 0.0
        %658 = vmatpush1.xpose.msra.mxu0 0.0
        %659 = vmatprep.subr.mxu0 0.0
        %660 = vmatpush1.xpose.msra.mxu0 0.0
        %661 = vmatprep.subr.mxu0 0.0
        %662 = vmatpush1.xpose.msra.mxu0 0.0
        %663 = vmatprep.subr.mxu0 0.0
        %664 = vmatpush1.xpose.msra.mxu0 0.0
        %665 = vmatprep.subr.mxu0 0.0
        %666 = vmatpush1.xpose.msra.mxu0 0.0
        %667 = vmatprep.subr.mxu0 0.0
        %668 = vmatpush1.xpose.msra.mxu0 0.0
        %669 = vmatprep.subr.mxu0 0.0
        %670 = vmatpush1.xpose.msra.mxu0 0.0
        %671 = vmatprep.subr.mxu0 0.0
        %672 = vmatpush1.xpose.msra.mxu0 0.0
        %673 = vmatprep.subr.mxu0 0.0
        %674 = vmatpush1.xpose.msra.mxu0 0.0
        %675 = vmatprep.subr.mxu0 0.0
        %676 = vmatpush1.xpose.msra.mxu0 0.0
        %677 = vmatprep.mubr.f32.mxu0 0.0
        %678 = vmatmul.mubr.f32.gmra.mrb[0].mxu0 %v609
        %v679 = vpop.f32.mrb[0].mxu0
        %v680 = vadd.f32 0.0, %v679
        %v681 = vpop.f32.mrb[0].mxu0
        %682 = vdwg.mxu0
        %v683 = vsel %vm278, %v680, -inf
        %684 = vmax.xlane.f32.xlu0 %v683
        %v685 = vpop.xlane.xlu0 %684
        %v686 = vsub.f32 %v680, %v685
        %v687 = vmul.f32 %v686, 1.442695
        %v688 = vpow.pop %v687
        %v689 = vsel %vm278, %v688, 0.0
        %690 = vadd.xlane.f32.xlu0 %v689
        %v691 = vpop.xlane.xlu0 %690
        %692 = vrot.lane.b32.xlu0 %v276, 112
        %v693 = vpop.permute.xlu0 %692
        %v696 = vsel %vm278, %v688, 0
        %698 = vmatprep.subr.mxu0 0.0
        %699 = vmatpush1.msra.mxu0 %v693
        %700 = vmatprep.subr.mxu0 0.0
        %701 = vmatpush1.msra.mxu0 0.0
        %702 = vmatprep.subr.mxu0 0.0
        %703 = vmatpush1.msra.mxu0 0.0
        %704 = vmatprep.subr.mxu0 0.0
        %705 = vmatpush1.msra.mxu0 0.0
        %706 = vmatprep.subr.mxu0 0.0
        %707 = vmatpush1.msra.mxu0 0.0
        %708 = vmatprep.subr.mxu0 0.0
        %709 = vmatpush1.msra.mxu0 0.0
        %710 = vmatprep.subr.mxu0 0.0
        %711 = vmatpush1.msra.mxu0 0.0
        %712 = vmatprep.subr.mxu0 0.0
        %713 = vmatpush1.msra.mxu0 0.0
        %714 = vmatprep.subr.mxu0 0.0
        %715 = vmatpush1.msra.mxu0 0.0
        %716 = vmatprep.subr.mxu0 0.0
        %717 = vmatpush1.msra.mxu0 0.0
        %718 = vmatprep.subr.mxu0 0.0
        %719 = vmatpush1.msra.mxu0 0.0
        %720 = vmatprep.subr.mxu0 0.0
        %721 = vmatpush1.msra.mxu0 0.0
        %722 = vmatprep.subr.mxu0 0.0
        %723 = vmatpush1.msra.mxu0 0.0
        %724 = vmatprep.subr.mxu0 0.0
        %725 = vmatpush1.msra.mxu0 0.0
        %726 = vmatprep.subr.mxu0 0.0
        %727 = vmatpush1.msra.mxu0 0.0
        %728 = vmatprep.subr.mxu0 0.0
        %729 = vmatpush1.msra.mxu0 0.0
        %730 = vmatprep.subr.mxu0 0.0
        %731 = vmatpush1.msra.mxu0 0.0
        %732 = vmatprep.subr.mxu0 0.0
        %733 = vmatpush1.msra.mxu0 0.0
        %734 = vmatprep.subr.mxu0 0.0
        %735 = vmatpush1.msra.mxu0 0.0
        %736 = vmatprep.subr.mxu0 0.0
        %737 = vmatpush1.msra.mxu0 0.0
        %738 = vmatprep.subr.mxu0 0.0
        %739 = vmatpush1.msra.mxu0 0.0
        %740 = vmatprep.subr.mxu0 0.0
        %741 = vmatpush1.msra.mxu0 0.0
        %742 = vmatprep.subr.mxu0 0.0
        %743 = vmatpush1.msra.mxu0 0.0
        %744 = vmatprep.subr.mxu0 0.0
        %745 = vmatpush1.msra.mxu0 0.0
        %746 = vmatprep.subr.mxu0 0.0
        %747 = vmatpush1.msra.mxu0 0.0
        %748 = vmatprep.subr.mxu0 0.0
        %749 = vmatpush1.msra.mxu0 0.0
        %750 = vmatprep.subr.mxu0 0.0
        %751 = vmatpush1.msra.mxu0 0.0
        %752 = vmatprep.subr.mxu0 0.0
        %753 = vmatpush1.msra.mxu0 0.0
        %754 = vmatprep.subr.mxu0 0.0
        %755 = vmatpush1.msra.mxu0 0.0
        %756 = vmatprep.subr.mxu0 0.0
        %757 = vmatpush1.msra.mxu0 0.0
        %758 = vmatprep.subr.mxu0 0.0
        %759 = vmatpush1.msra.mxu0 0.0
        %760 = vmatprep.subr.mxu0 0.0
        %761 = vmatpush1.msra.mxu0 0.0
        %762 = vmatprep.mubr.f32.mxu0 0.0
        %763 = vmatmul.mubr.f32.gmra.mrb[0].mxu0 %v696
        %v764 = vpop.f32.mrb[0].mxu0
        %v765 = vadd.f32 0.0, %v764
        %v766 = vpop.f32.mrb[0].mxu0
        %767 = vdwg.mxu0
        %v768 = vrcp.pop %v691
        %v769 = vmul.f32 %v765, %v768
        %770 = vrot.lane.b32.xlu0 %v277, 104
        %v771 = vpop.permute.xlu0 %770
        %772 = vrot.lane.b32.xlu0 %v275, 104
        %v773 = vpop.permute.xlu0 %772
        %v774 = vsel %vm278, %v771, 0
        %v776 = vsel %vm278, %v773, 0
        %778 = vmatprep.subr.mxu0 0.0
        %779 = vmatpush1.xpose.msra.mxu0 %v776
        %780 = vmatprep.subr.mxu0 0.0
        %781 = vmatpush1.xpose.msra.mxu0 0.0
        %782 = vmatprep.subr.mxu0 0.0
        %783 = vmatpush1.xpose.msra.mxu0 0.0
        %784 = vmatprep.subr.mxu0 0.0
        %785 = vmatpush1.xpose.msra.mxu0 0.0
        %786 = vmatprep.subr.mxu0 0.0
        %787 = vmatpush1.xpose.msra.mxu0 0.0
        %788 = vmatprep.subr.mxu0 0.0
        %789 = vmatpush1.xpose.msra.mxu0 0.0
        %790 = vmatprep.subr.mxu0 0.0
        %791 = vmatpush1.xpose.msra.mxu0 0.0
        %792 = vmatprep.subr.mxu0 0.0
        %793 = vmatpush1.xpose.msra.mxu0 0.0
        %794 = vmatprep.subr.mxu0 0.0
        %795 = vmatpush1.xpose.msra.mxu0 0.0
        %796 = vmatprep.subr.mxu0 0.0
        %797 = vmatpush1.xpose.msra.mxu0 0.0
        %798 = vmatprep.subr.mxu0 0.0
        %799 = vmatpush1.xpose.msra.mxu0 0.0
        %800 = vmatprep.subr.mxu0 0.0
        %801 = vmatpush1.xpose.msra.mxu0 0.0
        %802 = vmatprep.subr.mxu0 0.0
        %803 = vmatpush1.xpose.msra.mxu0 0.0
        %804 = vmatprep.subr.mxu0 0.0
        %805 = vmatpush1.xpose.msra.mxu0 0.0
        %806 = vmatprep.subr.mxu0 0.0
        %807 = vmatpush1.xpose.msra.mxu0 0.0
        %808 = vmatprep.subr.mxu0 0.0
        %809 = vmatpush1.xpose.msra.mxu0 0.0
        %810 = vmatprep.subr.mxu0 0.0
        %811 = vmatpush1.xpose.msra.mxu0 0.0
        %812 = vmatprep.subr.mxu0 0.0
        %813 = vmatpush1.xpose.msra.mxu0 0.0
        %814 = vmatprep.subr.mxu0 0.0
        %815 = vmatpush1.xpose.msra.mxu0 0.0
        %816 = vmatprep.subr.mxu0 0.0
        %817 = vmatpush1.xpose.msra.mxu0 0.0
        %818 = vmatprep.subr.mxu0 0.0
        %819 = vmatpush1.xpose.msra.mxu0 0.0
        %820 = vmatprep.subr.mxu0 0.0
        %821 = vmatpush1.xpose.msra.mxu0 0.0
        %822 = vmatprep.subr.mxu0 0.0
        %823 = vmatpush1.xpose.msra.mxu0 0.0
        %824 = vmatprep.subr.mxu0 0.0
        %825 = vmatpush1.xpose.msra.mxu0 0.0
        %826 = vmatprep.subr.mxu0 0.0
        %827 = vmatpush1.xpose.msra.mxu0 0.0
        %828 = vmatprep.subr.mxu0 0.0
        %829 = vmatpush1.xpose.msra.mxu0 0.0
        %830 = vmatprep.subr.mxu0 0.0
        %831 = vmatpush1.xpose.msra.mxu0 0.0
        %832 = vmatprep.subr.mxu0 0.0
        %833 = vmatpush1.xpose.msra.mxu0 0.0
        %834 = vmatprep.subr.mxu0 0.0
        %835 = vmatpush1.xpose.msra.mxu0 0.0
        %836 = vmatprep.subr.mxu0 0.0
        %837 = vmatpush1.xpose.msra.mxu0 0.0
        %838 = vmatprep.subr.mxu0 0.0
        %839 = vmatpush1.xpose.msra.mxu0 0.0
        %840 = vmatprep.subr.mxu0 0.0
        %841 = vmatpush1.xpose.msra.mxu0 0.0
        %842 = vmatprep.mubr.f32.mxu0 0.0
        %843 = vmatmul.mubr.f32.gmra.mrb[0].mxu0 %v774
        %v844 = vpop.f32.mrb[0].mxu0
        %v845 = vadd.f32 0.0, %v844
        %v846 = vpop.f32.mrb[0].mxu0
        %847 = vdwg.mxu0
        %v848 = vsel %vm278, %v845, -inf
        %849 = vmax.xlane.f32.xlu0 %v848
        %v850 = vpop.xlane.xlu0 %849
        %v851 = vsub.f32 %v845, %v850
        %v852 = vmul.f32 %v851, 1.442695
        %v853 = vpow.pop %v852
        %v854 = vsel %vm278, %v853, 0.0
        %855 = vadd.xlane.f32.xlu0 %v854
        %v856 = vpop.xlane.xlu0 %855
        %857 = vrot.lane.b32.xlu0 %v276, 104
        %v858 = vpop.permute.xlu0 %857
        %v861 = vsel %vm278, %v853, 0
        %863 = vmatprep.subr.mxu0 0.0
        %864 = vmatpush1.msra.mxu0 %v858
        %865 = vmatprep.subr.mxu0 0.0
        %866 = vmatpush1.msra.mxu0 0.0
        %867 = vmatprep.subr.mxu0 0.0
        %868 = vmatpush1.msra.mxu0 0.0
        %869 = vmatprep.subr.mxu0 0.0
        %870 = vmatpush1.msra.mxu0 0.0
        %871 = vmatprep.subr.mxu0 0.0
        %872 = vmatpush1.msra.mxu0 0.0
        %873 = vmatprep.subr.mxu0 0.0
        %874 = vmatpush1.msra.mxu0 0.0
        %875 = vmatprep.subr.mxu0 0.0
        %876 = vmatpush1.msra.mxu0 0.0
        %877 = vmatprep.subr.mxu0 0.0
        %878 = vmatpush1.msra.mxu0 0.0
        %879 = vmatprep.subr.mxu0 0.0
        %880 = vmatpush1.msra.mxu0 0.0
        %881 = vmatprep.subr.mxu0 0.0
        %882 = vmatpush1.msra.mxu0 0.0
        %883 = vmatprep.subr.mxu0 0.0
        %884 = vmatpush1.msra.mxu0 0.0
        %885 = vmatprep.subr.mxu0 0.0
        %886 = vmatpush1.msra.mxu0 0.0
        %887 = vmatprep.subr.mxu0 0.0
        %888 = vmatpush1.msra.mxu0 0.0
        %889 = vmatprep.subr.mxu0 0.0
        %890 = vmatpush1.msra.mxu0 0.0
        %891 = vmatprep.subr.mxu0 0.0
        %892 = vmatpush1.msra.mxu0 0.0
        %893 = vmatprep.subr.mxu0 0.0
        %894 = vmatpush1.msra.mxu0 0.0
        %895 = vmatprep.subr.mxu0 0.0
        %896 = vmatpush1.msra.mxu0 0.0
        %897 = vmatprep.subr.mxu0 0.0
        %898 = vmatpush1.msra.mxu0 0.0
        %899 = vmatprep.subr.mxu0 0.0
        %900 = vmatpush1.msra.mxu0 0.0
        %901 = vmatprep.subr.mxu0 0.0
        %902 = vmatpush1.msra.mxu0 0.0
        %903 = vmatprep.subr.mxu0 0.0
        %904 = vmatpush1.msra.mxu0 0.0
        %905 = vmatprep.subr.mxu0 0.0
        %906 = vmatpush1.msra.mxu0 0.0
        %907 = vmatprep.subr.mxu0 0.0
        %908 = vmatpush1.msra.mxu0 0.0
        %909 = vmatprep.subr.mxu0 0.0
        %910 = vmatpush1.msra.mxu0 0.0
        %911 = vmatprep.subr.mxu0 0.0
        %912 = vmatpush1.msra.mxu0 0.0
        %913 = vmatprep.subr.mxu0 0.0
        %914 = vmatpush1.msra.mxu0 0.0
        %915 = vmatprep.subr.mxu0 0.0
        %916 = vmatpush1.msra.mxu0 0.0
        %917 = vmatprep.subr.mxu0 0.0
        %918 = vmatpush1.msra.mxu0 0.0
        %919 = vmatprep.subr.mxu0 0.0
        %920 = vmatpush1.msra.mxu0 0.0
        %921 = vmatprep.subr.mxu0 0.0
        %922 = vmatpush1.msra.mxu0 0.0
        %923 = vmatprep.subr.mxu0 0.0
        %924 = vmatpush1.msra.mxu0 0.0
        %925 = vmatprep.subr.mxu0 0.0
        %926 = vmatpush1.msra.mxu0 0.0
        %927 = vmatprep.mubr.f32.mxu0 0.0
        %928 = vmatmul.mubr.f32.gmra.mrb[0].mxu0 %v861
        %v929 = vpop.f32.mrb[0].mxu0
        %v930 = vadd.f32 0.0, %v929
        %v931 = vpop.f32.mrb[0].mxu0
        %932 = vdwg.mxu0
        %v933 = vrcp.pop %v856
        %v934 = vmul.f32 %v930, %v933
        %936 = vrot.lane.b32.xlu0 %v604, 8
        %v937 = vpop.permute.xlu0 %936
        %940 = vrot.lane.b32.xlu0 %v769, 16
        %v941 = vpop.permute.xlu0 %940
        %944 = vrot.lane.b32.xlu0 %v934, 24
        %v945 = vpop.permute.xlu0 %944
        %v947 = vsel %vm278, %v438, %v937
        %vm948 = vcmask 130048
        %v949 = vsel %vm948, %v947, %v941
        %vm950 = vcmask 195584
        %v951 = vsel %vm950, %v949, %v945
        %vm952 = vcmask 261120
        %953 = vst.msk [vmem:[%s273] sm:$0xff] %vm952, %v951
        %s954 = sand.u32 %s125, 1
        %s955 = scalar_lea.sflag [#allocation4], %s954
        %s956 = sand.u32 %s125, 1
        %s957 = smul.addr %s956, 8
        %s958 = scalar_lea.vmem [#allocation8], %s957
        // Predicated region
        $region45: #{multi_head_attention.8} parent=31 // pred_check
          %p959 = pneg %p135
        $region46: #{multi_head_attention.8} parent=31 // pred_check_branch
          %961 = sbr.rel (%p959) target = $region48
        $region47: #{multi_head_attention.8} parent=31 // pred_region
          %s963 = ssub.s32 128, 128
          %964 = vsyncadd %s955, %s963
          %s965 = sadd.s32 %s28, %s27
          %s966 = smul.addr %s965, 128
          %s967 = scalar_lea.hbm %s3, %s966
          %s969 = sshll.u32 %s958, 4
          %s970 = int_to_ptr.vmem [resolvable:$true] %s969
          %972 = dma.vmem_to_hbm [thread:$0]  %s970, 128, %s967, %s955
        $region48: #{multi_head_attention.8} parent=31 // pred_fallthru
          _
      $region32: #{multi_head_attention.8} parent=5 // pred_fallthru
        _
      %p973 = scmp.le.s32.totalorder 2, %s18
      // Predicated region
      $region49: #{multi_head_attention.8} parent=5 // pred_check
        %p974 = pneg %p973
      $region50: #{multi_head_attention.8} parent=5 // pred_check_branch
        %976 = sbr.rel (%p974) target = $region52
      $region51: #{multi_head_attention.8} parent=5 // pred_region
        %s977 = ssub.s32 %s18, 2
        // Predicated region
        $region53: #{multi_head_attention.8} parent=51 // pred_check
          %p978 = pneg %p141
        $region54: #{multi_head_attention.8} parent=51 // pred_check_branch
          %980 = sbr.rel (%p978) target = $region56
        $region55: #{multi_head_attention.8} parent=51 // pred_region
          %s981 = sand.u32 %s126, 1
          %s982 = scalar_lea.sflag [#allocation4], %s981
          %s983 = sand.u32 %s126, 1
          %s984 = smul.addr %s983, 8
          %s985 = scalar_lea.vmem [#allocation8], %s984
          %986 = dma.done %s982, 128
        $region56: #{multi_head_attention.8} parent=51 // pred_fallthru
          _
      $region52: #{multi_head_attention.8} parent=5 // pred_fallthru
        _
    $region6: #{multi_head_attention.8} parent=1 // loop_footer
      %s22 = sadd.s32 1, %s18
    $region7: #{multi_head_attention.8} parent=1 // loop_footer_branch
      %17 = sbr.rel target = $region3
    $region8: #{multi_head_attention.8} parent=1 // loop_exit
      _
    %987 = vsyncpa [#allocation3], 1
    %s988 = scalar_lea.sflag [#allocation3], 1
    %989 = vsyncpa %s988, 1
    %990 = vsyncpa [#allocation6], 1
    %s991 = scalar_lea.sflag [#allocation6], 1
    %992 = vsyncpa %s991, 1
    %993 = vsyncpa [#allocation4], 1
    %s994 = scalar_lea.sflag [#allocation4], 1
    %995 = vsyncpa %s994, 1

</llo_original>
